<compile_context>
chip_gen: v7x
topology: tpu7x:2x2x1
jax: 0.10.0
libtpu: 0.0.40
codegen_flags: <defaults>
</compile_context>

<pallas_src>
import functools

import jax
import jax.numpy as jnp
from jax import lax
from jax.experimental import pallas as pl
from jax.experimental.pallas import tpu as pltpu


def _attention_kernel(q_ref, kv_ref,
                      wq_ref, bq_ref, wk_ref, bk_ref,
                      wv_ref, bv_ref, wc_ref, bc_ref,
                      out_ref, k_scr, v_scr, *, n_head):
    """One grid step = one (batch, q-tile). Weights are VMEM-resident bf16.

    K/V projections are computed only on the first q-tile of each batch row and
    kept in bf16 VMEM scratch for the remaining tiles (q-tile axis is "arbitrary",
    so iteration order within a batch row is sequential and the carry is valid).
    """
    t = pl.program_id(1)

    @pl.when(t == 0)
    def _project_kv():
        kv_in = kv_ref[0].astype(jnp.bfloat16)                      # (L, D)
        k = jnp.dot(kv_in, wk_ref[...],
                    preferred_element_type=jnp.float32) + bk_ref[...]
        v = jnp.dot(kv_in, wv_ref[...],
                    preferred_element_type=jnp.float32) + bv_ref[...]
        k_scr[...] = k.astype(jnp.bfloat16)
        v_scr[...] = v.astype(jnp.bfloat16)

    q_in = q_ref[0].astype(jnp.bfloat16)                             # (tq, D)
    tq, D = q_in.shape
    dh = D // n_head

    # Projection: bf16 MXU inputs, f32 accumulation, f32 bias add.
    # w_q / b_q already carry the 1/sqrt(dh) softmax scale (folded in the wrapper).
    q = (jnp.dot(q_in, wq_ref[...], preferred_element_type=jnp.float32)
         + bq_ref[...]).astype(jnp.bfloat16)                         # (tq, D)

    # Accumulate the output projection head-by-head into a lane-dense (tq, D) slab:
    #   out = sum_h softmax(q_h @ k_h^T) @ v_h @ w_concat[h*dh:(h+1)*dh, :]
    acc = jnp.zeros((tq, D), jnp.float32)
    for h in range(n_head):                  # n_head is small and compile-time static
        sl = slice(h * dh, (h + 1) * dh)
        qh = q[:, sl]                        # (tq, dh) bf16
        kh = k_scr[:, sl]                    # (L, dh)  bf16 (from scratch carry)
        vh = v_scr[:, sl]                    # (L, dh)  bf16

        # q_h @ k_h^T without materializing a transpose (MXU consumes K natively).
        s = lax.dot_general(qh, kh, (((1,), (1,)), ((), ())),
                            preferred_element_type=jnp.float32)      # (tq, L) f32
        m = jnp.max(s, axis=-1, keepdims=True)
        p = jnp.exp(s - m)
        denom = jnp.sum(p, axis=-1, keepdims=True)
        # Divide -> EUP reciprocal + VPU multiply.
        p = (p * pl.reciprocal(denom, approx=True)).astype(jnp.bfloat16)

        ctx_h = jnp.dot(p, vh, preferred_element_type=jnp.float32)   # (tq, dh) f32
        acc = acc + jnp.dot(ctx_h.astype(jnp.bfloat16), wc_ref[sl, :],
                            preferred_element_type=jnp.float32)      # (tq, D) f32

    out_ref[0] = (acc + bc_ref[...]).astype(out_ref.dtype)


def _pick_q_tile(L):
    for cand in (512, 256, 128):
        if L % cand == 0:
            return cand
    return L


def attention_forward(q, kv, params, n_head):
    B, L, D = q.shape
    assert D % n_head == 0, "d_model must be divisible by n_head"
    tq = _pick_q_tile(L)
    n_qt = L // tq
    dh = D // n_head
    scale = 1.0 / (dh ** 0.5)   # F.scaled_dot_product_attention default scale
    # TODO(synk): for very long L, also tile the key/value axis (flash-style online
    # softmax) instead of keeping full-L K/V per batch row.

    # Weights cast to bf16 once (half VMEM footprint, bf16 MXU rate); biases stay
    # f32 and are added after the f32 accumulation. The softmax scale is folded
    # into w_q / b_q (constant-sized, done once per call).
    wq = (params["wq"] * scale).astype(jnp.bfloat16)
    wk = params["wk"].astype(jnp.bfloat16)
    wv = params["wv"].astype(jnp.bfloat16)
    wc = params["wc"].astype(jnp.bfloat16)
    bq = params["bq"] * scale
    bk, bv, bc = params["bk"], params["bv"], params["bc"]

    kernel = functools.partial(_attention_kernel, n_head=n_head)

    q_spec = pl.BlockSpec((1, tq, D), lambda b, t: (b, t, 0))
    kv_spec = pl.BlockSpec((1, L, D), lambda b, t: (b, 0, 0))   # t-invariant: DMA'd once per b
    out_spec = pl.BlockSpec((1, tq, D), lambda b, t: (b, t, 0))
    # Grid-invariant weights/biases: whole array resident in VMEM (single copy,
    # no pipeline double-buffering).
    resident = pl.BlockSpec(memory_space=pltpu.MemorySpace.VMEM)

    # Advisory cost estimate for the XLA scheduler.
    flops = 8 * B * L * D * D + 4 * B * L * L * D
    bytes_accessed = 3 * B * L * D * 4 + 4 * D * D * 2 + 4 * D * 4
    transcendentals = B * n_head * L * L
    cost = pl.CostEstimate(flops=flops, transcendentals=transcendentals,
                           bytes_accessed=bytes_accessed)

    # Scoped-VMEM sizing: bf16 weights + double-buffered activation tiles + K/V
    # scratch + in-kernel intermediates, with 2x headroom, clamped to <= 64 MiB
    # (v7x physical per-TC VMEM).
    weight_bytes = 4 * D * D * 2 + 4 * D * 4
    pipe_bytes = 2 * (2 * tq * D + L * D) * 4       # double-buffered q/out/kv tiles
    scratch_bytes = 2 * L * D * 2                   # bf16 K/V carries
    work_bytes = (2 * L * D + 2 * tq * D + 2 * tq * L) * 4 + 2 * L * D * 2
    needed = weight_bytes + pipe_bytes + scratch_bytes + 2 * work_bytes
    vmem_limit = int(min(64 * 1024 * 1024, max(32 * 1024 * 1024, needed)))

    return pl.pallas_call(
        kernel,
        out_shape=jax.ShapeDtypeStruct((B, L, D), q.dtype),
        grid=(B, n_qt),
        in_specs=[q_spec, kv_spec,
                  resident, resident,    # w_q, b_q   (scale pre-folded)
                  resident, resident,    # w_k, b_k
                  resident, resident,    # w_v, b_v
                  resident, resident],   # w_concat, b_concat
        out_specs=out_spec,
        scratch_shapes=[pltpu.VMEM((L, D), jnp.bfloat16),   # projected K carry
                        pltpu.VMEM((L, D), jnp.bfloat16)],  # projected V carry
        compiler_params=pltpu.CompilerParams(
            # q-tile axis must be sequential ("arbitrary") for the K/V scratch carry.
            dimension_semantics=("parallel", "arbitrary"),
            vmem_limit_bytes=vmem_limit),
        cost_estimate=cost,
    )(q, kv, wq, bq, wk, bk, wv, bv, wc, bc)


def init_params(key, d_model):
    """Deterministic synthetic parameters (shapes match nn.Linear(d_model, d_model))."""
    keys = jax.random.split(key, 8)
    scale = 1.0 / (d_model ** 0.5)

    def w(k):
        return jax.random.uniform(k, (d_model, d_model), jnp.float32, -scale, scale)

    def b(k):
        return jax.random.uniform(k, (1, d_model), jnp.float32, -scale, scale)

    return {
        "wq": w(keys[0]), "bq": b(keys[1]),
        "wk": w(keys[2]), "bk": b(keys[3]),
        "wv": w(keys[4]), "bv": b(keys[5]),
        "wc": w(keys[6]), "bc": b(keys[7]),
    }


def attention_reference(q, kv, params, n_head):
    """Pure-JAX (f32) reference mirroring the PyTorch forward (mask=None, non-causal)."""
    B, L, D = q.shape
    dh = D // n_head

    qp = q @ params["wq"] + params["bq"]
    kp = kv @ params["wk"] + params["bk"]
    vp = kv @ params["wv"] + params["bv"]

    def split(t):
        return t.reshape(B, L, n_head, dh).transpose(0, 2, 1, 3)  # (B, H, L, dh)

    qs, ks, vs = split(qp), split(kp), split(vp)
    s = jnp.einsum("bhqd,bhkd->bhqk", qs, ks) / (dh ** 0.5)
    p = jax.nn.softmax(s, axis=-1)
    o = jnp.einsum("bhqk,bhkd->bhqd", p, vs)
    o = o.transpose(0, 2, 1, 3).reshape(B, L, D)
    return o @ params["wc"] + params["bc"]


if __name__ == "__main__":
    B, L, d_model, n_head = 2, 8, 32, 4

    key = jax.random.PRNGKey(0)
    k_params, k_q, k_kv = jax.random.split(key, 3)

    params = init_params(k_params, d_model)
    q = jax.random.normal(k_q, (B, L, d_model), jnp.float32)
    kv = jax.random.normal(k_kv, (B, L, d_model), jnp.float32)

    out = attention_forward(q, kv, params, n_head)
    out = jax.block_until_ready(out)

    ref = attention_reference(q, kv, params, n_head)
    assert out.shape == (B, L, d_model)
    max_err = jnp.max(jnp.abs(out - ref))
    # bf16 MXU inputs + approximate reciprocal => looser tolerance than pure f32.
    assert jnp.allclose(out, ref, atol=5e-2, rtol=5e-2), (
        f"mismatch vs JAX reference (max abs err {max_err})")

    print("KERNEL_OK")
</pallas_src>

<mosaic_0001>
module attributes {stable_mosaic.version = 11 : i64} {
  func.func @_attention_kernel(%arg0: i32, %arg1: i32, %arg2: memref<1x8x32xf32, #tpu.memory_space<vmem>>, %arg3: memref<1x8x32xf32, #tpu.memory_space<vmem>>, %arg4: memref<32x32xbf16, #tpu.memory_space<vmem>>, %arg5: memref<1x32xf32, #tpu.memory_space<vmem>>, %arg6: memref<32x32xbf16, #tpu.memory_space<vmem>>, %arg7: memref<1x32xf32, #tpu.memory_space<vmem>>, %arg8: memref<32x32xbf16, #tpu.memory_space<vmem>>, %arg9: memref<1x32xf32, #tpu.memory_space<vmem>>, %arg10: memref<32x32xbf16, #tpu.memory_space<vmem>>, %arg11: memref<1x32xf32, #tpu.memory_space<vmem>>, %arg12: memref<1x8x32xf32, #tpu.memory_space<vmem>>, %arg13: memref<8x32xbf16, #tpu.memory_space<vmem>>, %arg14: memref<8x32xbf16, #tpu.memory_space<vmem>>) attributes {dimension_semantics = [#tpu.dimension_semantics<parallel>, #tpu.dimension_semantics<arbitrary>], iteration_bounds = array<i64: 2, 1>, scalar_prefetch = 0 : i64, scratch_operands = 2 : i64, tpu.core_type = #tpu.core_type<tc>, window_params = [{transform_indices = @transform_0, window_bounds = array<i64: 1, 8, 32>}, {transform_indices = @transform_1, window_bounds = array<i64: 1, 8, 32>}, {pipeline_mode = #tpu.pipeline_mode<synchronous>, transform_indices = @transform_2, window_bounds = array<i64: 32, 32>}, {pipeline_mode = #tpu.pipeline_mode<synchronous>, transform_indices = @transform_3, window_bounds = array<i64: 1, 32>}, {pipeline_mode = #tpu.pipeline_mode<synchronous>, transform_indices = @transform_4, window_bounds = array<i64: 32, 32>}, {pipeline_mode = #tpu.pipeline_mode<synchronous>, transform_indices = @transform_5, window_bounds = array<i64: 1, 32>}, {pipeline_mode = #tpu.pipeline_mode<synchronous>, transform_indices = @transform_6, window_bounds = array<i64: 32, 32>}, {pipeline_mode = #tpu.pipeline_mode<synchronous>, transform_indices = @transform_7, window_bounds = array<i64: 1, 32>}, {pipeline_mode = #tpu.pipeline_mode<synchronous>, transform_indices = @transform_8, window_bounds = array<i64: 32, 32>}, {pipeline_mode = #tpu.pipeline_mode<synchronous>, transform_indices = @transform_9, window_bounds = array<i64: 1, 32>}, {transform_indices = @transform_10, window_bounds = array<i64: 1, 8, 32>}]} {
    %c0_i32 = arith.constant 0 : i32
    %0 = arith.cmpi eq, %arg1, %c0_i32 : i32
    %1 = arith.extui %0 : i1 to i32
    %c0_i32_0 = arith.constant 0 : i32
    %2 = arith.cmpi ne, %1, %c0_i32_0 : i32
    scf.if %2 {
      %c0_54 = arith.constant 0 : index
      %c0_55 = arith.constant 0 : index
      %c0_56 = arith.constant 0 : index
      %99 = vector.load %arg3[%c0_54, %c0_55, %c0_56] : memref<1x8x32xf32, #tpu.memory_space<vmem>>, vector<1x8x32xf32>
      %100 = vector.shape_cast %99 : vector<1x8x32xf32> to vector<8x32xf32>
      %101 = arith.truncf %100 : vector<8x32xf32> to vector<8x32xbf16>
      %c0_57 = arith.constant 0 : index
      %c0_58 = arith.constant 0 : index
      %102 = vector.load %arg6[%c0_57, %c0_58] : memref<32x32xbf16, #tpu.memory_space<vmem>>, vector<32x32xbf16>
      %cst_59 = arith.constant dense<0.000000e+00> : vector<8x32xf32>
      %103 = tpu.matmul %101, %102, %cst_59 {dimension_numbers = #tpu.dot_dimension_numbers<[1], [0], [0], [1], [0, 0, 1, 1], [], []>} : vector<8x32xbf16>, vector<32x32xbf16>, vector<8x32xf32> -> vector<8x32xf32>
      %c0_60 = arith.constant 0 : index
      %c0_61 = arith.constant 0 : index
      %104 = vector.load %arg7[%c0_60, %c0_61] : memref<1x32xf32, #tpu.memory_space<vmem>>, vector<1x32xf32>
      %105 = vector.broadcast %104 : vector<1x32xf32> to vector<8x32xf32>
      %106 = arith.addf %103, %105 : vector<8x32xf32>
      %c0_62 = arith.constant 0 : index
      %c0_63 = arith.constant 0 : index
      %107 = vector.load %arg8[%c0_62, %c0_63] : memref<32x32xbf16, #tpu.memory_space<vmem>>, vector<32x32xbf16>
      %cst_64 = arith.constant dense<0.000000e+00> : vector<8x32xf32>
      %108 = tpu.matmul %101, %107, %cst_64 {dimension_numbers = #tpu.dot_dimension_numbers<[1], [0], [0], [1], [0, 0, 1, 1], [], []>} : vector<8x32xbf16>, vector<32x32xbf16>, vector<8x32xf32> -> vector<8x32xf32>
      %c0_65 = arith.constant 0 : index
      %c0_66 = arith.constant 0 : index
      %109 = vector.load %arg9[%c0_65, %c0_66] : memref<1x32xf32, #tpu.memory_space<vmem>>, vector<1x32xf32>
      %110 = vector.broadcast %109 : vector<1x32xf32> to vector<8x32xf32>
      %111 = arith.addf %108, %110 : vector<8x32xf32>
      %112 = arith.truncf %106 : vector<8x32xf32> to vector<8x32xbf16>
      %c0_67 = arith.constant 0 : index
      %c0_68 = arith.constant 0 : index
      %113 = vector.load %arg13[%c0_67, %c0_68] : memref<8x32xbf16, #tpu.memory_space<vmem>>, vector<8x32xbf16>
      tpu.vector_store %arg13[%c0_67, %c0_68], %112 {strides = array<i32>} : memref<8x32xbf16, #tpu.memory_space<vmem>>, vector<8x32xbf16>,
      %114 = arith.truncf %111 : vector<8x32xf32> to vector<8x32xbf16>
      %c0_69 = arith.constant 0 : index
      %c0_70 = arith.constant 0 : index
      %115 = vector.load %arg14[%c0_69, %c0_70] : memref<8x32xbf16, #tpu.memory_space<vmem>>, vector<8x32xbf16>
      tpu.vector_store %arg14[%c0_69, %c0_70], %114 {strides = array<i32>} : memref<8x32xbf16, #tpu.memory_space<vmem>>, vector<8x32xbf16>,
    } else {
    }
    %c0 = arith.constant 0 : index
    %c0_1 = arith.constant 0 : index
    %c0_2 = arith.constant 0 : index
    %3 = vector.load %arg2[%c0, %c0_1, %c0_2] : memref<1x8x32xf32, #tpu.memory_space<vmem>>, vector<1x8x32xf32>
    %4 = vector.shape_cast %3 : vector<1x8x32xf32> to vector<8x32xf32>
    %5 = arith.truncf %4 : vector<8x32xf32> to vector<8x32xbf16>
    %c0_3 = arith.constant 0 : index
    %c0_4 = arith.constant 0 : index
    %6 = vector.load %arg4[%c0_3, %c0_4] : memref<32x32xbf16, #tpu.memory_space<vmem>>, vector<32x32xbf16>
    %cst = arith.constant dense<0.000000e+00> : vector<8x32xf32>
    %7 = tpu.matmul %5, %6, %cst {dimension_numbers = #tpu.dot_dimension_numbers<[1], [0], [0], [1], [0, 0, 1, 1], [], []>} : vector<8x32xbf16>, vector<32x32xbf16>, vector<8x32xf32> -> vector<8x32xf32>
    %c0_5 = arith.constant 0 : index
    %c0_6 = arith.constant 0 : index
    %8 = vector.load %arg5[%c0_5, %c0_6] : memref<1x32xf32, #tpu.memory_space<vmem>>, vector<1x32xf32>
    %9 = vector.broadcast %8 : vector<1x32xf32> to vector<8x32xf32>
    %10 = arith.addf %7, %9 : vector<8x32xf32>
    %11 = arith.truncf %10 : vector<8x32xf32> to vector<8x32xbf16>
    %cst_7 = arith.constant 0.000000e+00 : f32
    %12 = vector.broadcast %cst_7 : f32 to vector<8x32xf32>
    %13 = vector.extract_strided_slice %11 {offsets = [0, 0], sizes = [8, 8], strides = [1, 1]} : vector<8x32xbf16> to vector<8x8xbf16>
    %c0_8 = arith.constant 0 : index
    %c0_9 = arith.constant 0 : index
    %14 = vector.load %arg13[%c0_8, %c0_9] : memref<8x32xbf16, #tpu.memory_space<vmem>>, vector<8x8xbf16>
    %c0_10 = arith.constant 0 : index
    %c0_11 = arith.constant 0 : index
    %15 = vector.load %arg14[%c0_10, %c0_11] : memref<8x32xbf16, #tpu.memory_space<vmem>>, vector<8x8xbf16>
    %cst_12 = arith.constant dense<0.000000e+00> : vector<8x8xf32>
    %16 = tpu.matmul %13, %14, %cst_12 {dimension_numbers = #tpu.dot_dimension_numbers<[1], [1], [0], [0], [0, 0, 1, 0], [], []>} : vector<8x8xbf16>, vector<8x8xbf16>, vector<8x8xf32> -> vector<8x8xf32>
    %cst_13 = arith.constant dense<0xFF800000> : vector<8xf32>
    %17 = vector.multi_reduction <maximumf>, %16, %cst_13 [1] : vector<8x8xf32> to vector<8xf32>
    %18 = vector.shape_cast %17 : vector<8xf32> to vector<8x1xf32>
    %19 = vector.broadcast %18 : vector<8x1xf32> to vector<8x8xf32>
    %20 = arith.subf %16, %19 : vector<8x8xf32>
    %21 = math.exp %20 : vector<8x8xf32>
    %cst_14 = arith.constant dense<0.000000e+00> : vector<8xf32>
    %22 = vector.multi_reduction <add>, %21, %cst_14 [1] : vector<8x8xf32> to vector<8xf32>
    %23 = vector.shape_cast %22 : vector<8xf32> to vector<8x1xf32>
    %24 = tpu.reciprocal %23 {approx = true} : vector<8x1xf32> -> vector<8x1xf32>
    %25 = vector.broadcast %24 : vector<8x1xf32> to vector<8x8xf32>
    %26 = arith.mulf %21, %25 : vector<8x8xf32>
    %27 = arith.truncf %26 : vector<8x8xf32> to vector<8x8xbf16>
    %cst_15 = arith.constant dense<0.000000e+00> : vector<8x8xf32>
    %28 = tpu.matmul %27, %15, %cst_15 {dimension_numbers = #tpu.dot_dimension_numbers<[1], [0], [0], [1], [0, 0, 1, 1], [], []>} : vector<8x8xbf16>, vector<8x8xbf16>, vector<8x8xf32> -> vector<8x8xf32>
    %29 = arith.truncf %28 : vector<8x8xf32> to vector<8x8xbf16>
    %c0_16 = arith.constant 0 : index
    %c0_17 = arith.constant 0 : index
    %30 = vector.load %arg10[%c0_16, %c0_17] : memref<32x32xbf16, #tpu.memory_space<vmem>>, vector<8x32xbf16>
    %cst_18 = arith.constant dense<0.000000e+00> : vector<8x32xf32>
    %31 = tpu.matmul %29, %30, %cst_18 {dimension_numbers = #tpu.dot_dimension_numbers<[1], [0], [0], [1], [0, 0, 1, 1], [], []>} : vector<8x8xbf16>, vector<8x32xbf16>, vector<8x32xf32> -> vector<8x32xf32>
    %32 = arith.addf %12, %31 : vector<8x32xf32>
    %33 = vector.extract_strided_slice %11 {offsets = [0, 8], sizes = [8, 8], strides = [1, 1]} : vector<8x32xbf16> to vector<8x8xbf16>
    %c0_19 = arith.constant 0 : index
    %c8 = arith.constant 8 : index
    %34 = vector.load %arg13[%c0_19, %c8] : memref<8x32xbf16, #tpu.memory_space<vmem>>, vector<8x8xbf16>
    %c0_20 = arith.constant 0 : index
    %c8_21 = arith.constant 8 : index
    %35 = vector.load %arg14[%c0_20, %c8_21] : memref<8x32xbf16, #tpu.memory_space<vmem>>, vector<8x8xbf16>
    %cst_22 = arith.constant dense<0.000000e+00> : vector<8x8xf32>
    %36 = tpu.matmul %33, %34, %cst_22 {dimension_numbers = #tpu.dot_dimension_numbers<[1], [1], [0], [0], [0, 0, 1, 0], [], []>} : vector<8x8xbf16>, vector<8x8xbf16>, vector<8x8xf32> -> vector<8x8xf32>
    %cst_23 = arith.constant dense<0xFF800000> : vector<8xf32>
    %37 = vector.multi_reduction <maximumf>, %36, %cst_23 [1] : vector<8x8xf32> to vector<8xf32>
    %38 = vector.shape_cast %37 : vector<8xf32> to vector<8x1xf32>
    %39 = vector.broadcast %38 : vector<8x1xf32> to vector<8x8xf32>
    %40 = arith.subf %36, %39 : vector<8x8xf32>
    %41 = math.exp %40 : vector<8x8xf32>
    %cst_24 = arith.constant dense<0.000000e+00> : vector<8xf32>
    %42 = vector.multi_reduction <add>, %41, %cst_24 [1] : vector<8x8xf32> to vector<8xf32>
    %43 = vector.shape_cast %42 : vector<8xf32> to vector<8x1xf32>
    %44 = tpu.reciprocal %43 {approx = true} : vector<8x1xf32> -> vector<8x1xf32>
    %45 = vector.broadcast %44 : vector<8x1xf32> to vector<8x8xf32>
    %46 = arith.mulf %41, %45 : vector<8x8xf32>
    %47 = arith.truncf %46 : vector<8x8xf32> to vector<8x8xbf16>
    %cst_25 = arith.constant dense<0.000000e+00> : vector<8x8xf32>
    %48 = tpu.matmul %47, %35, %cst_25 {dimension_numbers = #tpu.dot_dimension_numbers<[1], [0], [0], [1], [0, 0, 1, 1], [], []>} : vector<8x8xbf16>, vector<8x8xbf16>, vector<8x8xf32> -> vector<8x8xf32>
    %49 = arith.truncf %48 : vector<8x8xf32> to vector<8x8xbf16>
    %c8_26 = arith.constant 8 : index
    %c0_27 = arith.constant 0 : index
    %50 = vector.load %arg10[%c8_26, %c0_27] : memref<32x32xbf16, #tpu.memory_space<vmem>>, vector<8x32xbf16>
    %cst_28 = arith.constant dense<0.000000e+00> : vector<8x32xf32>
    %51 = tpu.matmul %49, %50, %cst_28 {dimension_numbers = #tpu.dot_dimension_numbers<[1], [0], [0], [1], [0, 0, 1, 1], [], []>} : vector<8x8xbf16>, vector<8x32xbf16>, vector<8x32xf32> -> vector<8x32xf32>
    %52 = arith.addf %32, %51 : vector<8x32xf32>
    %53 = vector.extract_strided_slice %11 {offsets = [0, 16], sizes = [8, 8], strides = [1, 1]} : vector<8x32xbf16> to vector<8x8xbf16>
    %c0_29 = arith.constant 0 : index
    %c16 = arith.constant 16 : index
    %54 = vector.load %arg13[%c0_29, %c16] : memref<8x32xbf16, #tpu.memory_space<vmem>>, vector<8x8xbf16>
    %c0_30 = arith.constant 0 : index
    %c16_31 = arith.constant 16 : index
    %55 = vector.load %arg14[%c0_30, %c16_31] : memref<8x32xbf16, #tpu.memory_space<vmem>>, vector<8x8xbf16>
    %cst_32 = arith.constant dense<0.000000e+00> : vector<8x8xf32>
    %56 = tpu.matmul %53, %54, %cst_32 {dimension_numbers = #tpu.dot_dimension_numbers<[1], [1], [0], [0], [0, 0, 1, 0], [], []>} : vector<8x8xbf16>, vector<8x8xbf16>, vector<8x8xf32> -> vector<8x8xf32>
    %cst_33 = arith.constant dense<0xFF800000> : vector<8xf32>
    %57 = vector.multi_reduction <maximumf>, %56, %cst_33 [1] : vector<8x8xf32> to vector<8xf32>
    %58 = vector.shape_cast %57 : vector<8xf32> to vector<8x1xf32>
    %59 = vector.broadcast %58 : vector<8x1xf32> to vector<8x8xf32>
    %60 = arith.subf %56, %59 : vector<8x8xf32>
    %61 = math.exp %60 : vector<8x8xf32>
    %cst_34 = arith.constant dense<0.000000e+00> : vector<8xf32>
    %62 = vector.multi_reduction <add>, %61, %cst_34 [1] : vector<8x8xf32> to vector<8xf32>
    %63 = vector.shape_cast %62 : vector<8xf32> to vector<8x1xf32>
    %64 = tpu.reciprocal %63 {approx = true} : vector<8x1xf32> -> vector<8x1xf32>
    %65 = vector.broadcast %64 : vector<8x1xf32> to vector<8x8xf32>
    %66 = arith.mulf %61, %65 : vector<8x8xf32>
    %67 = arith.truncf %66 : vector<8x8xf32> to vector<8x8xbf16>
    %cst_35 = arith.constant dense<0.000000e+00> : vector<8x8xf32>
    %68 = tpu.matmul %67, %55, %cst_35 {dimension_numbers = #tpu.dot_dimension_numbers<[1], [0], [0], [1], [0, 0, 1, 1], [], []>} : vector<8x8xbf16>, vector<8x8xbf16>, vector<8x8xf32> -> vector<8x8xf32>
    %69 = arith.truncf %68 : vector<8x8xf32> to vector<8x8xbf16>
    %c16_36 = arith.constant 16 : index
    %c0_37 = arith.constant 0 : index
    %70 = vector.load %arg10[%c16_36, %c0_37] : memref<32x32xbf16, #tpu.memory_space<vmem>>, vector<8x32xbf16>
    %cst_38 = arith.constant dense<0.000000e+00> : vector<8x32xf32>
    %71 = tpu.matmul %69, %70, %cst_38 {dimension_numbers = #tpu.dot_dimension_numbers<[1], [0], [0], [1], [0, 0, 1, 1], [], []>} : vector<8x8xbf16>, vector<8x32xbf16>, vector<8x32xf32> -> vector<8x32xf32>
    %72 = arith.addf %52, %71 : vector<8x32xf32>
    %73 = vector.extract_strided_slice %11 {offsets = [0, 24], sizes = [8, 8], strides = [1, 1]} : vector<8x32xbf16> to vector<8x8xbf16>
    %c0_39 = arith.constant 0 : index
    %c24 = arith.constant 24 : index
    %74 = vector.load %arg13[%c0_39, %c24] : memref<8x32xbf16, #tpu.memory_space<vmem>>, vector<8x8xbf16>
    %c0_40 = arith.constant 0 : index
    %c24_41 = arith.constant 24 : index
    %75 = vector.load %arg14[%c0_40, %c24_41] : memref<8x32xbf16, #tpu.memory_space<vmem>>, vector<8x8xbf16>
    %cst_42 = arith.constant dense<0.000000e+00> : vector<8x8xf32>
    %76 = tpu.matmul %73, %74, %cst_42 {dimension_numbers = #tpu.dot_dimension_numbers<[1], [1], [0], [0], [0, 0, 1, 0], [], []>} : vector<8x8xbf16>, vector<8x8xbf16>, vector<8x8xf32> -> vector<8x8xf32>
    %cst_43 = arith.constant dense<0xFF800000> : vector<8xf32>
    %77 = vector.multi_reduction <maximumf>, %76, %cst_43 [1] : vector<8x8xf32> to vector<8xf32>
    %78 = vector.shape_cast %77 : vector<8xf32> to vector<8x1xf32>
    %79 = vector.broadcast %78 : vector<8x1xf32> to vector<8x8xf32>
    %80 = arith.subf %76, %79 : vector<8x8xf32>
    %81 = math.exp %80 : vector<8x8xf32>
    %cst_44 = arith.constant dense<0.000000e+00> : vector<8xf32>
    %82 = vector.multi_reduction <add>, %81, %cst_44 [1] : vector<8x8xf32> to vector<8xf32>
    %83 = vector.shape_cast %82 : vector<8xf32> to vector<8x1xf32>
    %84 = tpu.reciprocal %83 {approx = true} : vector<8x1xf32> -> vector<8x1xf32>
    %85 = vector.broadcast %84 : vector<8x1xf32> to vector<8x8xf32>
    %86 = arith.mulf %81, %85 : vector<8x8xf32>
    %87 = arith.truncf %86 : vector<8x8xf32> to vector<8x8xbf16>
    %cst_45 = arith.constant dense<0.000000e+00> : vector<8x8xf32>
    %88 = tpu.matmul %87, %75, %cst_45 {dimension_numbers = #tpu.dot_dimension_numbers<[1], [0], [0], [1], [0, 0, 1, 1], [], []>} : vector<8x8xbf16>, vector<8x8xbf16>, vector<8x8xf32> -> vector<8x8xf32>
    %89 = arith.truncf %88 : vector<8x8xf32> to vector<8x8xbf16>
    %c24_46 = arith.constant 24 : index
    %c0_47 = arith.constant 0 : index
    %90 = vector.load %arg10[%c24_46, %c0_47] : memref<32x32xbf16, #tpu.memory_space<vmem>>, vector<8x32xbf16>
    %cst_48 = arith.constant dense<0.000000e+00> : vector<8x32xf32>
    %91 = tpu.matmul %89, %90, %cst_48 {dimension_numbers = #tpu.dot_dimension_numbers<[1], [0], [0], [1], [0, 0, 1, 1], [], []>} : vector<8x8xbf16>, vector<8x32xbf16>, vector<8x32xf32> -> vector<8x32xf32>
    %92 = arith.addf %72, %91 : vector<8x32xf32>
    %c0_49 = arith.constant 0 : index
    %c0_50 = arith.constant 0 : index
    %93 = vector.load %arg11[%c0_49, %c0_50] : memref<1x32xf32, #tpu.memory_space<vmem>>, vector<1x32xf32>
    %94 = vector.broadcast %93 : vector<1x32xf32> to vector<8x32xf32>
    %95 = arith.addf %92, %94 : vector<8x32xf32>
    %c0_51 = arith.constant 0 : index
    %c0_52 = arith.constant 0 : index
    %c0_53 = arith.constant 0 : index
    %96 = vector.load %arg12[%c0_51, %c0_52, %c0_53] : memref<1x8x32xf32, #tpu.memory_space<vmem>>, vector<1x8x32xf32>
    %97 = vector.shape_cast %96 : vector<1x8x32xf32> to vector<8x32xf32>
    %98 = vector.shape_cast %95 : vector<8x32xf32> to vector<1x8x32xf32>
    tpu.vector_store %arg12[%c0_51, %c0_52, %c0_53], %98 {strides = array<i32>} : memref<1x8x32xf32, #tpu.memory_space<vmem>>, vector<1x8x32xf32>,
    return
  }
  func.func @transform_0(%arg0: i32, %arg1: i32) -> (i32, i32, i32) {
    %c0_i32 = arith.constant 0 : i32
    %c0_i32_0 = arith.constant 0 : i32
    return %arg0, %arg1, %c0_i32 : i32, i32, i32
  }
  func.func @transform_1(%arg0: i32, %arg1: i32) -> (i32, i32, i32) {
    %c0_i32 = arith.constant 0 : i32
    %c0_i32_0 = arith.constant 0 : i32
    %c0_i32_1 = arith.constant 0 : i32
    return %arg0, %c0_i32, %c0_i32_0 : i32, i32, i32
  }
  func.func @transform_2(%arg0: i32, %arg1: i32) -> (i32, i32) {
    %c0_i32 = arith.constant 0 : i32
    %c0_i32_0 = arith.constant 0 : i32
    %c0_i32_1 = arith.constant 0 : i32
    return %c0_i32, %c0_i32_0 : i32, i32
  }
  func.func @transform_3(%arg0: i32, %arg1: i32) -> (i32, i32) {
    %c0_i32 = arith.constant 0 : i32
    %c0_i32_0 = arith.constant 0 : i32
    %c0_i32_1 = arith.constant 0 : i32
    return %c0_i32, %c0_i32_0 : i32, i32
  }
  func.func @transform_4(%arg0: i32, %arg1: i32) -> (i32, i32) {
    %c0_i32 = arith.constant 0 : i32
    %c0_i32_0 = arith.constant 0 : i32
    %c0_i32_1 = arith.constant 0 : i32
    return %c0_i32, %c0_i32_0 : i32, i32
  }
  func.func @transform_5(%arg0: i32, %arg1: i32) -> (i32, i32) {
    %c0_i32 = arith.constant 0 : i32
    %c0_i32_0 = arith.constant 0 : i32
    %c0_i32_1 = arith.constant 0 : i32
    return %c0_i32, %c0_i32_0 : i32, i32
  }
  func.func @transform_6(%arg0: i32, %arg1: i32) -> (i32, i32) {
    %c0_i32 = arith.constant 0 : i32
    %c0_i32_0 = arith.constant 0 : i32
    %c0_i32_1 = arith.constant 0 : i32
    return %c0_i32, %c0_i32_0 : i32, i32
  }
  func.func @transform_7(%arg0: i32, %arg1: i32) -> (i32, i32) {
    %c0_i32 = arith.constant 0 : i32
    %c0_i32_0 = arith.constant 0 : i32
    %c0_i32_1 = arith.constant 0 : i32
    return %c0_i32, %c0_i32_0 : i32, i32
  }
  func.func @transform_8(%arg0: i32, %arg1: i32) -> (i32, i32) {
    %c0_i32 = arith.constant 0 : i32
    %c0_i32_0 = arith.constant 0 : i32
    %c0_i32_1 = arith.constant 0 : i32
    return %c0_i32, %c0_i32_0 : i32, i32
  }
  func.func @transform_9(%arg0: i32, %arg1: i32) -> (i32, i32) {
    %c0_i32 = arith.constant 0 : i32
    %c0_i32_0 = arith.constant 0 : i32
    %c0_i32_1 = arith.constant 0 : i32
    return %c0_i32, %c0_i32_0 : i32, i32
  }
  func.func @transform_10(%arg0: i32, %arg1: i32) -> (i32, i32, i32) {
    %c0_i32 = arith.constant 0 : i32
    %c0_i32_0 = arith.constant 0 : i32
    return %arg0, %arg1, %c0_i32 : i32, i32, i32
  }
}

</mosaic_0001>

<llo_original>
// kernel: tpu_custom_call.1
$region0: #{tpu_custom_call.1}
  #allocation0 [shape = 'u32[]', space=smem, size = 0x4, offset = 0x4, fixed_abs, tag = 'smem constant byte address 0x4 - core index']
  #allocation1 [shape = 'u32[144,128]{1,0:T(1,128)}', space=vmem, size = 0x12000, scoped, tag = 'internal scratch']
  #allocation2 [shape = 'bf16[8,32]{1,0:T(8,128)(2,1)}', space=vmem, size = 0x800, scoped, tag = 'scratch operand']
  #allocation3 [shape = 'bf16[8,32]{1,0:T(8,128)(2,1)}', space=vmem, size = 0x800, scoped, tag = 'scratch operand']
  %s0 = inlined_call_operand.hbm [shape: f32[2,8,32], index: 0, kind: input, shape index: {}]
  %s1 = inlined_call_operand.hbm [shape: f32[2,8,32], index: 1, kind: input, shape index: {}]
  %s2 = inlined_call_operand.hbm [shape: bf16[32,32], index: 2, kind: input, shape index: {}]
  %s3 = inlined_call_operand.vmem [shape: f32[1,32], index: 3, kind: input, shape index: {}]
  %s4 = inlined_call_operand.hbm [shape: bf16[32,32], index: 4, kind: input, shape index: {}]
  %s5 = inlined_call_operand.vmem [shape: f32[1,32], index: 5, kind: input, shape index: {}]
  %s6 = inlined_call_operand.vmem [shape: bf16[32,32], index: 6, kind: input, shape index: {}]
  %s7 = inlined_call_operand.vmem [shape: f32[1,32], index: 7, kind: input, shape index: {}]
  %s8 = inlined_call_operand.hbm [shape: bf16[32,32], index: 8, kind: input, shape index: {}]
  %s9 = inlined_call_operand.vmem [shape: f32[1,32], index: 9, kind: input, shape index: {}]
  %s10 = inlined_call_operand.hbm [shape: f32[2,8,32], index: 10, kind: output, shape index: {}]
  %s11 = sld [smem:[#allocation0]]
  $region97: #{tpu_custom_call.1} parent=0
    _
  %s13 = ssub.s32 1, %s11
  %s14 = scalar_select 0, %s13, %s11
  $region1: #{tpu_custom_call.1} parent=0
    #allocation4 [shape = 'u8[8192]{0}', space=vmem, size = 0x2000, scoped, tag = 'input window, operand 0']
    #allocation5 [shape = 's32[2]{0}', space=sflag, size = 0x8, scoped, tag = 'scoped memory for tpu_custom_call.1']
    #allocation6 [shape = 's32[2]{0}', space=sflag, size = 0x8, scoped, tag = 'scoped memory for tpu_custom_call.1']
    #allocation7 [shape = 'u8[8192]{0}', space=vmem, size = 0x2000, scoped, tag = 'input window, operand 1']
    #allocation8 [shape = 's32[2]{0}', space=sflag, size = 0x8, scoped, tag = 'scoped memory for tpu_custom_call.1']
    #allocation9 [shape = 'u8[8192]{0}', space=vmem, size = 0x2000, scoped, tag = 'input window, operand 2, single buffered']
    #allocation10 [shape = 'u8[8192]{0}', space=vmem, size = 0x2000, scoped, tag = 'input window, operand 4, single buffered']
    #allocation11 [shape = 's32[1]{0}', space=sflag, size = 0x4, scoped, tag = 'scoped memory for tpu_custom_call.1']
    #allocation12 [shape = 'u8[8192]{0}', space=vmem, size = 0x2000, scoped, tag = 'input window, operand 8, single buffered']
    #allocation13 [shape = 'u8[8192]{0}', space=vmem, size = 0x2000, scoped, tag = 'output window, operand 0']
    %15 = vsyncpa [#allocation5], 0
    %s16 = scalar_lea.sflag [#allocation5], 1
    %17 = vsyncpa %s16, 0
    %18 = vsyncpa [#allocation8], 0
    %s19 = scalar_lea.sflag [#allocation8], 1
    %20 = vsyncpa %s19, 0
    %21 = vsyncpa [#allocation11], 0
    %22 = vsyncpa [#allocation6], 0
    %s23 = scalar_lea.sflag [#allocation6], 1
    %24 = vsyncpa %s23, 0
    loop: start=0, step=1, limit=4
    $region2: #{tpu_custom_call.1} parent=1 // loop_pre_header
      _
    $region3: #{tpu_custom_call.1} parent=1 // loop_header
      %s26 = sphi 0, %s30
      %p27 = scmp.ge.s32.totalorder %s26, 4
      %s33 = sphi 0, %s45
      %s34 = sphi 0, %s41
      %s35 = sphi 0, %s33
      %s36 = sphi 0, %s34
      %s37 = sphi 0, %s35
      %s38 = sphi 0, %s36
      %s50 = sphi 0, %s52
      %s53 = sphi 0, %s50
      %s54 = sphi 0, %s53
      %s70 = sphi 0, %s54
      %s76 = sphi 0, %s78
      %s79 = sphi 0, %s76
      %s80 = sphi 0, %s79
      %s96 = sphi 0, %s80
      %s100 = sphi 0, %s100
      %s102 = sphi 0, %s100
      %s103 = sphi 0, %s102
      %s117 = sphi 0, %s103
      %s121 = sphi 0, %s121
      %s123 = sphi 0, %s121
      %s124 = sphi 0, %s123
      %s138 = sphi 0, %s124
      %s142 = sphi 0, %s142
      %s144 = sphi 0, %s142
      %s145 = sphi 0, %s144
      %s159 = sphi 0, %s145
      %s163 = sphi 0, %s163
      %s165 = sphi 0, %s163
      %s166 = sphi 0, %s165
      %s180 = sphi 0, %s166
      %s184 = sphi 0, %s184
      %s186 = sphi 0, %s184
      %s187 = sphi 0, %s186
      %s201 = sphi 0, %s187
      %s205 = sphi 0, %s205
      %s207 = sphi 0, %s205
      %s208 = sphi 0, %s207
      %s222 = sphi 0, %s208
      %s226 = sphi 0, %s226
      %s228 = sphi 0, %s226
      %s229 = sphi 0, %s228
      %s243 = sphi 0, %s229
      %s247 = sphi 0, %s247
      %s249 = sphi 0, %s247
      %s250 = sphi 0, %s249
      %s264 = sphi 0, %s250
      %s272 = sphi 0, %s274
      %s275 = sphi 0, %s272
      %s276 = sphi 0, %s275
      %s292 = sphi 0, %s276
    $region4: #{tpu_custom_call.1} parent=1 // loop_header_branch
      %29 = sbr.rel (%p27) target = $region8
    $region5: #{tpu_custom_call.1} parent=1 // loop_body
      %s31 = ssub.s32 %s26, 1
      %s32 = ssub.s32 %s26, 2
      %s39 = sadd.s32 1, %s34
      %p40 = scmp.ge.s32.totalorder %s39, 1
      %s41 = scalar_select %p40, 0, %s39
      %s42 = sadd.s32 1, %s33
      %s43 = scalar_select %p40, %s42, %s33
      %p44 = scmp.ge.s32.totalorder %s43, 2
      %s45 = scalar_select %p44, 0, %s43
      %s46 = ssub.s32 %s33, %s45
      %s47 = ssub.s32 %s34, %s41
      %s48 = sor.u32 %s46, %s47
      %p49 = scmp.eq.s32.totalorder %s48, 0
      %s51 = sadd.s32 %s50, 1
      %s52 = scalar_select %p49, %s50, %s51
      %p55 = pneg %p49
      %p56 = scmp.eq.s32.totalorder %s26, 1
      %p57 = por %p55, %p56
      %p58 = scmp.ne.s32.totalorder %s50, %s53
      %p59 = scmp.eq.s32.totalorder %s26, 0
      %p60 = por %p58, %p59
      %p61 = scmp.ne.s32.totalorder %s50, %s53
      %p62 = scmp.eq.s32.totalorder %s31, 1
      %p63 = por %p61, %p62
      %p64 = scmp.ne.s32.totalorder %s53, %s54
      %p65 = scmp.eq.s32.totalorder %s31, 0
      %p66 = por %p64, %p65
      %p67 = scmp.ne.s32.totalorder %s53, %s54
      %p68 = scmp.eq.s32.totalorder %s32, 1
      %p69 = por %p67, %p68
      %p71 = scmp.ne.s32.totalorder %s54, %s70
      %p72 = scmp.eq.s32.totalorder %s32, 0
      %p73 = por %p71, %p72
      %s74 = ssub.s32 %s33, %s45
      %p75 = scmp.eq.s32.totalorder %s74, 0
      %s77 = sadd.s32 %s76, 1
      %s78 = scalar_select %p75, %s76, %s77
      %p81 = pneg %p75
      %p82 = scmp.eq.s32.totalorder %s26, 1
      %p83 = por %p81, %p82
      %p84 = scmp.ne.s32.totalorder %s76, %s79
      %p85 = scmp.eq.s32.totalorder %s26, 0
      %p86 = por %p84, %p85
      %p87 = scmp.ne.s32.totalorder %s76, %s79
      %p88 = scmp.eq.s32.totalorder %s31, 1
      %p89 = por %p87, %p88
      %p90 = scmp.ne.s32.totalorder %s79, %s80
      %p91 = scmp.eq.s32.totalorder %s31, 0
      %p92 = por %p90, %p91
      %p93 = scmp.ne.s32.totalorder %s79, %s80
      %p94 = scmp.eq.s32.totalorder %s32, 1
      %p95 = por %p93, %p94
      %p97 = scmp.ne.s32.totalorder %s80, %s96
      %p98 = scmp.eq.s32.totalorder %s32, 0
      %p99 = por %p97, %p98
      %s101 = sadd.s32 %s100, 1
      %p104 = scmp.eq.s32.totalorder %s26, 1
      %p105 = scmp.ne.s32.totalorder %s100, %s102
      %p106 = scmp.eq.s32.totalorder %s26, 0
      %p107 = por %p105, %p106
      %p108 = scmp.ne.s32.totalorder %s100, %s102
      %p109 = scmp.eq.s32.totalorder %s31, 1
      %p110 = por %p108, %p109
      %p111 = scmp.ne.s32.totalorder %s102, %s103
      %p112 = scmp.eq.s32.totalorder %s31, 0
      %p113 = por %p111, %p112
      %p114 = scmp.ne.s32.totalorder %s102, %s103
      %p115 = scmp.eq.s32.totalorder %s32, 1
      %p116 = por %p114, %p115
      %p118 = scmp.ne.s32.totalorder %s103, %s117
      %p119 = scmp.eq.s32.totalorder %s32, 0
      %p120 = por %p118, %p119
      %s122 = sadd.s32 %s121, 1
      %p125 = scmp.eq.s32.totalorder %s26, 1
      %p126 = scmp.ne.s32.totalorder %s121, %s123
      %p127 = scmp.eq.s32.totalorder %s26, 0
      %p128 = por %p126, %p127
      %p129 = scmp.ne.s32.totalorder %s121, %s123
      %p130 = scmp.eq.s32.totalorder %s31, 1
      %p131 = por %p129, %p130
      %p132 = scmp.ne.s32.totalorder %s123, %s124
      %p133 = scmp.eq.s32.totalorder %s31, 0
      %p134 = por %p132, %p133
      %p135 = scmp.ne.s32.totalorder %s123, %s124
      %p136 = scmp.eq.s32.totalorder %s32, 1
      %p137 = por %p135, %p136
      %p139 = scmp.ne.s32.totalorder %s124, %s138
      %p140 = scmp.eq.s32.totalorder %s32, 0
      %p141 = por %p139, %p140
      %s143 = sadd.s32 %s142, 1
      %p146 = scmp.eq.s32.totalorder %s26, 1
      %p147 = scmp.ne.s32.totalorder %s142, %s144
      %p148 = scmp.eq.s32.totalorder %s26, 0
      %p149 = por %p147, %p148
      %p150 = scmp.ne.s32.totalorder %s142, %s144
      %p151 = scmp.eq.s32.totalorder %s31, 1
      %p152 = por %p150, %p151
      %p153 = scmp.ne.s32.totalorder %s144, %s145
      %p154 = scmp.eq.s32.totalorder %s31, 0
      %p155 = por %p153, %p154
      %p156 = scmp.ne.s32.totalorder %s144, %s145
      %p157 = scmp.eq.s32.totalorder %s32, 1
      %p158 = por %p156, %p157
      %p160 = scmp.ne.s32.totalorder %s145, %s159
      %p161 = scmp.eq.s32.totalorder %s32, 0
      %p162 = por %p160, %p161
      %s164 = sadd.s32 %s163, 1
      %p167 = scmp.eq.s32.totalorder %s26, 1
      %p168 = scmp.ne.s32.totalorder %s163, %s165
      %p169 = scmp.eq.s32.totalorder %s26, 0
      %p170 = por %p168, %p169
      %p171 = scmp.ne.s32.totalorder %s163, %s165
      %p172 = scmp.eq.s32.totalorder %s31, 1
      %p173 = por %p171, %p172
      %p174 = scmp.ne.s32.totalorder %s165, %s166
      %p175 = scmp.eq.s32.totalorder %s31, 0
      %p176 = por %p174, %p175
      %p177 = scmp.ne.s32.totalorder %s165, %s166
      %p178 = scmp.eq.s32.totalorder %s32, 1
      %p179 = por %p177, %p178
      %p181 = scmp.ne.s32.totalorder %s166, %s180
      %p182 = scmp.eq.s32.totalorder %s32, 0
      %p183 = por %p181, %p182
      %s185 = sadd.s32 %s184, 1
      %p188 = scmp.eq.s32.totalorder %s26, 1
      %p189 = scmp.ne.s32.totalorder %s184, %s186
      %p190 = scmp.eq.s32.totalorder %s26, 0
      %p191 = por %p189, %p190
      %p192 = scmp.ne.s32.totalorder %s184, %s186
      %p193 = scmp.eq.s32.totalorder %s31, 1
      %p194 = por %p192, %p193
      %p195 = scmp.ne.s32.totalorder %s186, %s187
      %p196 = scmp.eq.s32.totalorder %s31, 0
      %p197 = por %p195, %p196
      %p198 = scmp.ne.s32.totalorder %s186, %s187
      %p199 = scmp.eq.s32.totalorder %s32, 1
      %p200 = por %p198, %p199
      %p202 = scmp.ne.s32.totalorder %s187, %s201
      %p203 = scmp.eq.s32.totalorder %s32, 0
      %p204 = por %p202, %p203
      %s206 = sadd.s32 %s205, 1
      %p209 = scmp.eq.s32.totalorder %s26, 1
      %p210 = scmp.ne.s32.totalorder %s205, %s207
      %p211 = scmp.eq.s32.totalorder %s26, 0
      %p212 = por %p210, %p211
      %p213 = scmp.ne.s32.totalorder %s205, %s207
      %p214 = scmp.eq.s32.totalorder %s31, 1
      %p215 = por %p213, %p214
      %p216 = scmp.ne.s32.totalorder %s207, %s208
      %p217 = scmp.eq.s32.totalorder %s31, 0
      %p218 = por %p216, %p217
      %p219 = scmp.ne.s32.totalorder %s207, %s208
      %p220 = scmp.eq.s32.totalorder %s32, 1
      %p221 = por %p219, %p220
      %p223 = scmp.ne.s32.totalorder %s208, %s222
      %p224 = scmp.eq.s32.totalorder %s32, 0
      %p225 = por %p223, %p224
      %s227 = sadd.s32 %s226, 1
      %p230 = scmp.eq.s32.totalorder %s26, 1
      %p231 = scmp.ne.s32.totalorder %s226, %s228
      %p232 = scmp.eq.s32.totalorder %s26, 0
      %p233 = por %p231, %p232
      %p234 = scmp.ne.s32.totalorder %s226, %s228
      %p235 = scmp.eq.s32.totalorder %s31, 1
      %p236 = por %p234, %p235
      %p237 = scmp.ne.s32.totalorder %s228, %s229
      %p238 = scmp.eq.s32.totalorder %s31, 0
      %p239 = por %p237, %p238
      %p240 = scmp.ne.s32.totalorder %s228, %s229
      %p241 = scmp.eq.s32.totalorder %s32, 1
      %p242 = por %p240, %p241
      %p244 = scmp.ne.s32.totalorder %s229, %s243
      %p245 = scmp.eq.s32.totalorder %s32, 0
      %p246 = por %p244, %p245
      %s248 = sadd.s32 %s247, 1
      %p251 = scmp.eq.s32.totalorder %s26, 1
      %p252 = scmp.ne.s32.totalorder %s247, %s249
      %p253 = scmp.eq.s32.totalorder %s26, 0
      %p254 = por %p252, %p253
      %p255 = scmp.ne.s32.totalorder %s247, %s249
      %p256 = scmp.eq.s32.totalorder %s31, 1
      %p257 = por %p255, %p256
      %p258 = scmp.ne.s32.totalorder %s249, %s250
      %p259 = scmp.eq.s32.totalorder %s31, 0
      %p260 = por %p258, %p259
      %p261 = scmp.ne.s32.totalorder %s249, %s250
      %p262 = scmp.eq.s32.totalorder %s32, 1
      %p263 = por %p261, %p262
      %p265 = scmp.ne.s32.totalorder %s250, %s264
      %p266 = scmp.eq.s32.totalorder %s32, 0
      %p267 = por %p265, %p266
      %s268 = ssub.s32 %s33, %s45
      %s269 = ssub.s32 %s34, %s41
      %s270 = sor.u32 %s268, %s269
      %p271 = scmp.eq.s32.totalorder %s270, 0
      %s273 = sadd.s32 %s272, 1
      %s274 = scalar_select %p271, %s272, %s273
      %p277 = pneg %p271
      %p278 = scmp.eq.s32.totalorder %s26, 1
      %p279 = por %p277, %p278
      %p280 = scmp.ne.s32.totalorder %s272, %s275
      %p281 = scmp.eq.s32.totalorder %s26, 0
      %p282 = por %p280, %p281
      %p283 = scmp.ne.s32.totalorder %s272, %s275
      %p284 = scmp.eq.s32.totalorder %s31, 1
      %p285 = por %p283, %p284
      %p286 = scmp.ne.s32.totalorder %s275, %s276
      %p287 = scmp.eq.s32.totalorder %s31, 0
      %p288 = por %p286, %p287
      %p289 = scmp.ne.s32.totalorder %s275, %s276
      %p290 = scmp.eq.s32.totalorder %s32, 1
      %p291 = por %p289, %p290
      %p293 = scmp.ne.s32.totalorder %s276, %s292
      %p294 = scmp.eq.s32.totalorder %s32, 0
      %p295 = por %p293, %p294
      %p296 = scmp.le.s32.totalorder 1, %s26
      %p297 = scmp.lt.s32.totalorder %s26, 3
      %p298 = pnand %p296, %p297
      %p299 = pneg %p298
      // Predicated region
      $region9: #{tpu_custom_call.1} parent=5 // pred_check
        _
      $region10: #{tpu_custom_call.1} parent=5 // pred_check_branch
        %301 = sbr.rel (%p298) target = $region12
      $region11: #{tpu_custom_call.1} parent=5 // pred_region
        %s302 = ssub.s32 %s26, 1
        // Predicated region
        $region13: #{tpu_custom_call.1} parent=11 // pred_check
          %p303 = pneg %p113
        $region14: #{tpu_custom_call.1} parent=11 // pred_check_branch
          %305 = sbr.rel (%p303) target = $region16
        $region15: #{tpu_custom_call.1} parent=11 // pred_region
          %s307 = ssub.s32 256, 256
          %308 = vsyncadd [#allocation8], %s307
          %s309 = sshll.u32 [#allocation9], 4
          %s310 = int_to_ptr.vmem [resolvable:$true] %s309
          %315 = dma.hbm_to_vmem [thread:$0]  %s2, 256, %s310, [#allocation8], 64, 64, 4
        $region16: #{tpu_custom_call.1} parent=11 // pred_fallthru
          _
        // Predicated region
        $region17: #{tpu_custom_call.1} parent=11 // pred_check
          %p316 = pneg %p134
        $region18: #{tpu_custom_call.1} parent=11 // pred_check_branch
          %318 = sbr.rel (%p316) target = $region20
        $region19: #{tpu_custom_call.1} parent=11 // pred_region
          _
        $region20: #{tpu_custom_call.1} parent=11 // pred_fallthru
          _
        // Predicated region
        $region21: #{tpu_custom_call.1} parent=11 // pred_check
          %p319 = pneg %p155
        $region22: #{tpu_custom_call.1} parent=11 // pred_check_branch
          %321 = sbr.rel (%p319) target = $region24
        $region23: #{tpu_custom_call.1} parent=11 // pred_region
          %s323 = ssub.s32 256, 256
          %324 = vsyncadd [#allocation11], %s323
          %s325 = sshll.u32 [#allocation10], 4
          %s326 = int_to_ptr.vmem [resolvable:$true] %s325
          %331 = dma.hbm_to_vmem [thread:$0]  %s4, 256, %s326, [#allocation11], 64, 64, 4
        $region24: #{tpu_custom_call.1} parent=11 // pred_fallthru
          _
        // Predicated region
        $region25: #{tpu_custom_call.1} parent=11 // pred_check
          %p332 = pneg %p176
        $region26: #{tpu_custom_call.1} parent=11 // pred_check_branch
          %334 = sbr.rel (%p332) target = $region28
        $region27: #{tpu_custom_call.1} parent=11 // pred_region
          _
        $region28: #{tpu_custom_call.1} parent=11 // pred_fallthru
          _
        // Predicated region
        $region29: #{tpu_custom_call.1} parent=11 // pred_check
          %p335 = pneg %p197
        $region30: #{tpu_custom_call.1} parent=11 // pred_check_branch
          %337 = sbr.rel (%p335) target = $region32
        $region31: #{tpu_custom_call.1} parent=11 // pred_region
          _
        $region32: #{tpu_custom_call.1} parent=11 // pred_fallthru
          _
        // Predicated region
        $region33: #{tpu_custom_call.1} parent=11 // pred_check
          %p338 = pneg %p218
        $region34: #{tpu_custom_call.1} parent=11 // pred_check_branch
          %340 = sbr.rel (%p338) target = $region36
        $region35: #{tpu_custom_call.1} parent=11 // pred_region
          _
        $region36: #{tpu_custom_call.1} parent=11 // pred_fallthru
          _
        // Predicated region
        $region37: #{tpu_custom_call.1} parent=11 // pred_check
          %p341 = pneg %p239
        $region38: #{tpu_custom_call.1} parent=11 // pred_check_branch
          %343 = sbr.rel (%p341) target = $region40
        $region39: #{tpu_custom_call.1} parent=11 // pred_region
          %s345 = ssub.s32 256, 256
          %346 = vsyncadd [#allocation11], %s345
          %s347 = sshll.u32 [#allocation12], 4
          %s348 = int_to_ptr.vmem [resolvable:$true] %s347
          %353 = dma.hbm_to_vmem [thread:$0]  %s8, 256, %s348, [#allocation11], 64, 64, 4
        $region40: #{tpu_custom_call.1} parent=11 // pred_fallthru
          _
        // Predicated region
        $region41: #{tpu_custom_call.1} parent=11 // pred_check
          %p354 = pneg %p260
        $region42: #{tpu_custom_call.1} parent=11 // pred_check_branch
          %356 = sbr.rel (%p354) target = $region44
        $region43: #{tpu_custom_call.1} parent=11 // pred_region
          _
        $region44: #{tpu_custom_call.1} parent=11 // pred_fallthru
          _
      $region12: #{tpu_custom_call.1} parent=5 // pred_fallthru
        _
      %p357 = scmp.lt.s32.totalorder %s26, 2
      // Predicated region
      $region45: #{tpu_custom_call.1} parent=5 // pred_check
        %p358 = pneg %p357
      $region46: #{tpu_custom_call.1} parent=5 // pred_check_branch
        %360 = sbr.rel (%p358) target = $region48
      $region47: #{tpu_custom_call.1} parent=5 // pred_region
        // Predicated region
        $region49: #{tpu_custom_call.1} parent=47 // pred_check
          %p361 = pneg %p60
        $region50: #{tpu_custom_call.1} parent=47 // pred_check_branch
          %363 = sbr.rel (%p361) target = $region52
        $region51: #{tpu_custom_call.1} parent=47 // pred_region
          %s364 = sand.u32 %s50, 1
          %s365 = scalar_lea.sflag [#allocation5], %s364
          %s366 = sand.u32 %s50, 1
          %s367 = smul.addr %s366, 8
          %s368 = scalar_lea.vmem [#allocation4], %s367
          %s370 = ssub.s32 128, 128
          %371 = vsyncadd %s365, %s370
          %s372 = sadd.s32 %s34, %s33
          %s373 = smul.addr %s372, 128
          %s374 = scalar_lea.hbm %s0, %s373
          %s376 = sshll.u32 %s368, 4
          %s377 = int_to_ptr.vmem [resolvable:$true] %s376
          %379 = dma.hbm_to_vmem [thread:$0]  %s374, 128, %s377, %s365
        $region52: #{tpu_custom_call.1} parent=47 // pred_fallthru
          _
        // Predicated region
        $region53: #{tpu_custom_call.1} parent=47 // pred_check
          %p380 = pneg %p86
        $region54: #{tpu_custom_call.1} parent=47 // pred_check_branch
          %382 = sbr.rel (%p380) target = $region56
        $region55: #{tpu_custom_call.1} parent=47 // pred_region
          %s383 = sand.u32 %s26, 1
          %s384 = scalar_lea.sflag [#allocation8], %s383
          %s385 = sand.u32 %s76, 1
          %s386 = smul.addr %s385, 8
          %s387 = scalar_lea.vmem [#allocation7], %s386
          %s389 = ssub.s32 128, 128
          %390 = vsyncadd %s384, %s389
          %s391 = smul.addr %s33, 128
          %s392 = scalar_lea.hbm %s1, %s391
          %s394 = sshll.u32 %s387, 4
          %s395 = int_to_ptr.vmem [resolvable:$true] %s394
          %397 = dma.hbm_to_vmem [thread:$0]  %s392, 128, %s395, %s384
        $region56: #{tpu_custom_call.1} parent=47 // pred_fallthru
          _
      $region48: #{tpu_custom_call.1} parent=5 // pred_fallthru
        _
      %p398 = scmp.le.s32.totalorder 1, %s26
      %p399 = scmp.lt.s32.totalorder %s26, 3
      %p400 = pnand %p398, %p399
      %p401 = pneg %p400
      // Predicated region
      $region57: #{tpu_custom_call.1} parent=5 // pred_check
        _
      $region58: #{tpu_custom_call.1} parent=5 // pred_check_branch
        %403 = sbr.rel (%p400) target = $region60
      $region59: #{tpu_custom_call.1} parent=5 // pred_region
        %s404 = ssub.s32 %s26, 1
        %s405 = sand.u32 %s53, 1
        %s406 = scalar_lea.sflag [#allocation5], %s405
        %s407 = sand.u32 %s53, 1
        %s408 = smul.addr %s407, 8
        %s409 = scalar_lea.vmem [#allocation4], %s408
        // Predicated region
        $region61: #{tpu_custom_call.1} parent=59 // pred_check
          %p410 = pneg %p66
        $region62: #{tpu_custom_call.1} parent=59 // pred_check_branch
          %412 = sbr.rel (%p410) target = $region64
        $region63: #{tpu_custom_call.1} parent=59 // pred_region
          %413 = dma.done %s406, 128
        $region64: #{tpu_custom_call.1} parent=59 // pred_fallthru
          _
        %s414 = sand.u32 %s31, 1
        %s415 = scalar_lea.sflag [#allocation8], %s414
        %s416 = sand.u32 %s79, 1
        %s417 = smul.addr %s416, 8
        %s418 = scalar_lea.vmem [#allocation7], %s417
        // Predicated region
        $region65: #{tpu_custom_call.1} parent=59 // pred_check
          %p419 = pneg %p92
        $region66: #{tpu_custom_call.1} parent=59 // pred_check_branch
          %421 = sbr.rel (%p419) target = $region68
        $region67: #{tpu_custom_call.1} parent=59 // pred_region
          %422 = dma.done %s415, 128
        $region68: #{tpu_custom_call.1} parent=59 // pred_fallthru
          _
        // Predicated region
        $region69: #{tpu_custom_call.1} parent=59 // pred_check
          %p423 = pneg %p113
        $region70: #{tpu_custom_call.1} parent=59 // pred_check_branch
          %425 = sbr.rel (%p423) target = $region72
        $region71: #{tpu_custom_call.1} parent=59 // pred_region
          %426 = dma.done [#allocation8], 256
        $region72: #{tpu_custom_call.1} parent=59 // pred_fallthru
          _
        // Predicated region
        $region73: #{tpu_custom_call.1} parent=59 // pred_check
          %p427 = pneg %p155
        $region74: #{tpu_custom_call.1} parent=59 // pred_check_branch
          %429 = sbr.rel (%p427) target = $region76
        $region75: #{tpu_custom_call.1} parent=59 // pred_region
          %430 = dma.done [#allocation11], 256
        $region76: #{tpu_custom_call.1} parent=59 // pred_fallthru
          _
        // Predicated region
        $region77: #{tpu_custom_call.1} parent=59 // pred_check
          %p431 = pneg %p239
        $region78: #{tpu_custom_call.1} parent=59 // pred_check_branch
          %433 = sbr.rel (%p431) target = $region80
        $region79: #{tpu_custom_call.1} parent=59 // pred_region
          %434 = dma.done [#allocation11], 256
        $region80: #{tpu_custom_call.1} parent=59 // pred_fallthru
          _
        %s435 = sand.u32 %s53, 1
        %s436 = scalar_lea.sflag [#allocation5], %s435
        %s437 = sand.u32 %s53, 1
        %s438 = smul.addr %s437, 8
        %s439 = scalar_lea.vmem [#allocation4], %s438
        %p440 = pneg %p66
        %p441 = pneg %p63
        %s442 = sand.u32 %s31, 1
        %s443 = scalar_lea.sflag [#allocation8], %s442
        %s444 = sand.u32 %s79, 1
        %s445 = smul.addr %s444, 8
        %s446 = scalar_lea.vmem [#allocation7], %s445
        %p447 = pneg %p92
        %p448 = pneg %p89
        %p449 = pneg %p113
        %p450 = pneg %p110
        %p451 = pneg %p134
        %p452 = pneg %p131
        %p453 = pneg %p155
        %p454 = pneg %p152
        %p455 = pneg %p176
        %p456 = pneg %p173
        %p457 = pneg %p197
        %p458 = pneg %p194
        %p459 = pneg %p218
        %p460 = pneg %p215
        %p461 = pneg %p239
        %p462 = pneg %p236
        %p463 = pneg %p260
        %p464 = pneg %p257
        %p465 = pneg %p288
        %p466 = pneg %p285
        %s467 = sand.u32 %s275, 1
        %s468 = scalar_lea.sflag [#allocation6], %s467
        %s469 = sand.u32 %s275, 1
        %s470 = smul.addr %s469, 8
        %s471 = scalar_lea.vmem [#allocation13], %s470
        %p473 = scmp.eq.s32.totalorder %s36, 0
        // Predicated region
        $region81: #{tpu_custom_call.1} parent=59 // pred_check
          %p474 = pneg %p473
        $region82: #{tpu_custom_call.1} parent=59 // pred_check_branch
          %476 = sbr.rel (%p474) target = $region84
        $region83: #{tpu_custom_call.1} parent=59 // pred_region
          %v477 = vld [vmem:[%s418] sm:$0xff]
          %v478 = vpack.c.bf16 %v477, %v477
          %v479 = vld [vmem:[#allocation10] sm:$0xf]
          %v480 = vld [vmem:[#allocation10 + $0x4] sm:$0xf]
          %v481 = vld [vmem:[#allocation10 + $0x8] sm:$0xf]
          %v482 = vld [vmem:[#allocation10 + $0xc] sm:$0xf]
          %v483 = vld [vmem:[%s5] sm:$0x1]
          %v485 = vlaneseq
          %v486 = vshrl.u32 %v485, 7
          %v487 = vsub.s32 0, %v486
          %v488 = vrot.slane %v483, %v487
          %v494 = vunpack.c.l.b16 %v479
          %v495 = vunpack.c.l.b16 %v480
          %v496 = vunpack.c.l.b16 %v481
          %v497 = vunpack.c.l.b16 %v482
          %v498 = vpack.c.b16 %v495, %v494
          %v499 = vpack.c.b16 %v497, %v496
          %vm502 = vcmask 261120
          %v504 = vsel %vm502, %v478, 0
          %506 = vmatprep.subr.bf16.mxu0 0
          %507 = vmatpush1.bf16.msra.mxu0 %v498
          %508 = vmatprep.subr.bf16.mxu0 0
          %509 = vmatpush1.bf16.msra.mxu0 %v499
          %510 = vmatprep.subr.bf16.mxu0 0
          %511 = vmatpush1.bf16.msra.mxu0 0
          %512 = vmatprep.subr.bf16.mxu0 0
          %513 = vmatpush1.bf16.msra.mxu0 0
          %514 = vmatprep.subr.bf16.mxu0 0
          %515 = vmatpush1.bf16.msra.mxu0 0
          %516 = vmatprep.subr.bf16.mxu0 0
          %517 = vmatpush1.bf16.msra.mxu0 0
          %518 = vmatprep.subr.bf16.mxu0 0
          %519 = vmatpush1.bf16.msra.mxu0 0
          %520 = vmatprep.subr.bf16.mxu0 0
          %521 = vmatpush1.bf16.msra.mxu0 0
          %522 = vmatprep.subr.bf16.mxu0 0
          %523 = vmatpush1.bf16.msra.mxu0 0
          %524 = vmatprep.subr.bf16.mxu0 0
          %525 = vmatpush1.bf16.msra.mxu0 0
          %526 = vmatprep.subr.bf16.mxu0 0
          %527 = vmatpush1.bf16.msra.mxu0 0
          %528 = vmatprep.subr.bf16.mxu0 0
          %529 = vmatpush1.bf16.msra.mxu0 0
          %530 = vmatprep.subr.bf16.mxu0 0
          %531 = vmatpush1.bf16.msra.mxu0 0
          %532 = vmatprep.subr.bf16.mxu0 0
          %533 = vmatpush1.bf16.msra.mxu0 0
          %534 = vmatprep.subr.bf16.mxu0 0
          %535 = vmatpush1.bf16.msra.mxu0 0
          %536 = vmatprep.subr.bf16.mxu0 0
          %537 = vmatpush1.bf16.msra.mxu0 0
          %538 = vmatprep.mubr.bf16.mxu0 0
          %539 = vmatmul.mubr.bf16.gmra.mrb[0].mxu0 %v504
          %v540 = vpop.f32.mrb[0].mxu0
          %v541 = vadd.f32 %v488, %v540
          %v542 = vpop.f32.mrb[0].mxu0
          %v543 = vpop.f32.mrb[0].mxu0
          %v544 = vpop.f32.mrb[0].mxu0
          %545 = vdwg.mxu0
          %v546 = vld [vmem:[%s6] sm:$0xf]
          %v547 = vld [vmem:[%s6 + $0x4] sm:$0xf]
          %v548 = vld [vmem:[%s6 + $0x8] sm:$0xf]
          %v549 = vld [vmem:[%s6 + $0xc] sm:$0xf]
          %v550 = vld [vmem:[%s7] sm:$0x1]
          %v552 = vlaneseq
          %v553 = vshrl.u32 %v552, 7
          %v554 = vsub.s32 0, %v553
          %v555 = vrot.slane %v550, %v554
          %v561 = vunpack.c.l.b16 %v546
          %v562 = vunpack.c.l.b16 %v547
          %v563 = vunpack.c.l.b16 %v548
          %v564 = vunpack.c.l.b16 %v549
          %v565 = vpack.c.b16 %v562, %v561
          %v566 = vpack.c.b16 %v564, %v563
          %569 = vmatprep.subr.bf16.mxu0 0
          %570 = vmatpush1.bf16.msra.mxu0 %v565
          %571 = vmatprep.subr.bf16.mxu0 0
          %572 = vmatpush1.bf16.msra.mxu0 %v566
          %573 = vmatprep.subr.bf16.mxu0 0
          %574 = vmatpush1.bf16.msra.mxu0 0
          %575 = vmatprep.subr.bf16.mxu0 0
          %576 = vmatpush1.bf16.msra.mxu0 0
          %577 = vmatprep.subr.bf16.mxu0 0
          %578 = vmatpush1.bf16.msra.mxu0 0
          %579 = vmatprep.subr.bf16.mxu0 0
          %580 = vmatpush1.bf16.msra.mxu0 0
          %581 = vmatprep.subr.bf16.mxu0 0
          %582 = vmatpush1.bf16.msra.mxu0 0
          %583 = vmatprep.subr.bf16.mxu0 0
          %584 = vmatpush1.bf16.msra.mxu0 0
          %585 = vmatprep.subr.bf16.mxu0 0
          %586 = vmatpush1.bf16.msra.mxu0 0
          %587 = vmatprep.subr.bf16.mxu0 0
          %588 = vmatpush1.bf16.msra.mxu0 0
          %589 = vmatprep.subr.bf16.mxu0 0
          %590 = vmatpush1.bf16.msra.mxu0 0
          %591 = vmatprep.subr.bf16.mxu0 0
          %592 = vmatpush1.bf16.msra.mxu0 0
          %593 = vmatprep.subr.bf16.mxu0 0
          %594 = vmatpush1.bf16.msra.mxu0 0
          %595 = vmatprep.subr.bf16.mxu0 0
          %596 = vmatpush1.bf16.msra.mxu0 0
          %597 = vmatprep.subr.bf16.mxu0 0
          %598 = vmatpush1.bf16.msra.mxu0 0
          %599 = vmatprep.subr.bf16.mxu0 0
          %600 = vmatpush1.bf16.msra.mxu0 0
          %601 = vmatprep.mubr.bf16.mxu0 0
          %602 = vmatmul.mubr.bf16.gmra.mrb[0].mxu0 %v504
          %v603 = vpop.f32.mrb[0].mxu0
          %v604 = vadd.f32 %v555, %v603
          %v605 = vpop.f32.mrb[0].mxu0
          %v606 = vpop.f32.mrb[0].mxu0
          %v607 = vpop.f32.mrb[0].mxu0
          %608 = vdwg.mxu0
          %v609 = vpack.c.bf16 %v541, %v541
          %vm610 = vcmask 257024
          %611 = vst.msk [vmem:[#allocation2] sm:$0xf] %vm610, %v609
          %v612 = vpack.c.bf16 %v604, %v604
          %613 = vst.msk [vmem:[#allocation3] sm:$0xf] %vm610, %v612
        $region84: #{tpu_custom_call.1} parent=59 // pred_fallthru
          _
        %v614 = vld [vmem:[%s409] sm:$0xff]
        %v615 = vpack.c.bf16 %v614, %v614
        %v616 = vld [vmem:[#allocation9] sm:$0xf]
        %v617 = vld [vmem:[#allocation9 + $0x4] sm:$0xf]
        %v618 = vld [vmem:[#allocation9 + $0x8] sm:$0xf]
        %v619 = vld [vmem:[#allocation9 + $0xc] sm:$0xf]
        %v620 = vld [vmem:[%s3] sm:$0x1]
        %v622 = vlaneseq
        %v623 = vshrl.u32 %v622, 7
        %v624 = vsub.s32 0, %v623
        %v625 = vrot.slane %v620, %v624
        %v631 = vunpack.c.l.b16 %v616
        %v632 = vunpack.c.l.b16 %v617
        %v633 = vunpack.c.l.b16 %v618
        %v634 = vunpack.c.l.b16 %v619
        %v635 = vpack.c.b16 %v632, %v631
        %v636 = vpack.c.b16 %v634, %v633
        %vm639 = vcmask 261120
        %v641 = vsel %vm639, %v615, 0
        %643 = vmatprep.subr.bf16.mxu0 0
        %644 = vmatpush1.bf16.msra.mxu0 %v635
        %645 = vmatprep.subr.bf16.mxu0 0
        %646 = vmatpush1.bf16.msra.mxu0 %v636
        %647 = vmatprep.subr.bf16.mxu0 0
        %648 = vmatpush1.bf16.msra.mxu0 0
        %649 = vmatprep.subr.bf16.mxu0 0
        %650 = vmatpush1.bf16.msra.mxu0 0
        %651 = vmatprep.subr.bf16.mxu0 0
        %652 = vmatpush1.bf16.msra.mxu0 0
        %653 = vmatprep.subr.bf16.mxu0 0
        %654 = vmatpush1.bf16.msra.mxu0 0
        %655 = vmatprep.subr.bf16.mxu0 0
        %656 = vmatpush1.bf16.msra.mxu0 0
        %657 = vmatprep.subr.bf16.mxu0 0
        %658 = vmatpush1.bf16.msra.mxu0 0
        %659 = vmatprep.subr.bf16.mxu0 0
        %660 = vmatpush1.bf16.msra.mxu0 0
        %661 = vmatprep.subr.bf16.mxu0 0
        %662 = vmatpush1.bf16.msra.mxu0 0
        %663 = vmatprep.subr.bf16.mxu0 0
        %664 = vmatpush1.bf16.msra.mxu0 0
        %665 = vmatprep.subr.bf16.mxu0 0
        %666 = vmatpush1.bf16.msra.mxu0 0
        %667 = vmatprep.subr.bf16.mxu0 0
        %668 = vmatpush1.bf16.msra.mxu0 0
        %669 = vmatprep.subr.bf16.mxu0 0
        %670 = vmatpush1.bf16.msra.mxu0 0
        %671 = vmatprep.subr.bf16.mxu0 0
        %672 = vmatpush1.bf16.msra.mxu0 0
        %673 = vmatprep.subr.bf16.mxu0 0
        %674 = vmatpush1.bf16.msra.mxu0 0
        %675 = vmatprep.mubr.bf16.mxu0 0
        %676 = vmatmul.mubr.bf16.gmra.mrb[0].mxu0 %v641
        %v677 = vpop.f32.mrb[0].mxu0
        %v678 = vadd.f32 %v625, %v677
        %v679 = vpop.f32.mrb[0].mxu0
        %v680 = vpop.f32.mrb[0].mxu0
        %v681 = vpop.f32.mrb[0].mxu0
        %682 = vdwg.mxu0
        %v683 = vpack.c.bf16 %v678, %v678
        %v684 = vld [vmem:[#allocation2] sm:$0xf]
        %v685 = vld [vmem:[#allocation3] sm:$0xf]
        %vm686 = vcmask 64512
        %v688 = vsel %vm686, %v683, 0
        %v691 = vsel %vm686, %v684, 0
        %693 = vmatprep.subr.bf16.mxu0 0
        %694 = vmatpush1.bf16.xpose.msra.mxu0 %v691
        %695 = vmatprep.subr.bf16.mxu0 0
        %696 = vmatpush1.bf16.xpose.msra.mxu0 0
        %697 = vmatprep.subr.bf16.mxu0 0
        %698 = vmatpush1.bf16.xpose.msra.mxu0 0
        %699 = vmatprep.subr.bf16.mxu0 0
        %700 = vmatpush1.bf16.xpose.msra.mxu0 0
        %701 = vmatprep.subr.bf16.mxu0 0
        %702 = vmatpush1.bf16.xpose.msra.mxu0 0
        %703 = vmatprep.subr.bf16.mxu0 0
        %704 = vmatpush1.bf16.xpose.msra.mxu0 0
        %705 = vmatprep.subr.bf16.mxu0 0
        %706 = vmatpush1.bf16.xpose.msra.mxu0 0
        %707 = vmatprep.subr.bf16.mxu0 0
        %708 = vmatpush1.bf16.xpose.msra.mxu0 0
        %709 = vmatprep.subr.bf16.mxu0 0
        %710 = vmatpush1.bf16.xpose.msra.mxu0 0
        %711 = vmatprep.subr.bf16.mxu0 0
        %712 = vmatpush1.bf16.xpose.msra.mxu0 0
        %713 = vmatprep.subr.bf16.mxu0 0
        %714 = vmatpush1.bf16.xpose.msra.mxu0 0
        %715 = vmatprep.subr.bf16.mxu0 0
        %716 = vmatpush1.bf16.xpose.msra.mxu0 0
        %717 = vmatprep.subr.bf16.mxu0 0
        %718 = vmatpush1.bf16.xpose.msra.mxu0 0
        %719 = vmatprep.subr.bf16.mxu0 0
        %720 = vmatpush1.bf16.xpose.msra.mxu0 0
        %721 = vmatprep.subr.bf16.mxu0 0
        %722 = vmatpush1.bf16.xpose.msra.mxu0 0
        %723 = vmatprep.subr.bf16.mxu0 0
        %724 = vmatpush1.bf16.xpose.msra.mxu0 0
        %725 = vmatprep.mubr.bf16.mxu0 0
        %726 = vmatmul.mubr.bf16.gmra.mrb[0].mxu0 %v688
        %v727 = vpop.f32.mrb[0].mxu0
        %v728 = vadd.f32 0.0, %v727
        %v729 = vpop.f32.mrb[0].mxu0
        %v730 = vpop.f32.mrb[0].mxu0
        %v731 = vpop.f32.mrb[0].mxu0
        %732 = vdwg.mxu0
        %v733 = vsel %vm686, %v728, -inf
        %734 = vmax.xlane.f32.xlu0 %v733
        %v735 = vpop.xlane.xlu0 %734
        %v736 = vsub.f32 %v728, %v735
        %v737 = vmul.f32 %v736, 1.442695
        %v738 = vpow.pop %v737
        %v739 = vsel %vm686, %v738, 0.0
        %740 = vadd.xlane.f32.xlu0 %v739
        %v741 = vpop.xlane.xlu0 %740
        %v742 = vrcp.pop %v741
        %v743 = vmul.f32 %v738, %v742
        %v744 = vpack.c.bf16 %v743, %v743
        %v746 = vsel %vm686, %v744, 0
        %vm748 = vcmask 1043456
        %v750 = vsel %vm748, %v685, 0
        %752 = vmatprep.subr.bf16.mxu0 0
        %753 = vmatpush1.bf16.msra.mxu0 %v750
        %754 = vmatprep.subr.bf16.mxu0 0
        %755 = vmatpush1.bf16.msra.mxu0 0
        %756 = vmatprep.subr.bf16.mxu0 0
        %757 = vmatpush1.bf16.msra.mxu0 0
        %758 = vmatprep.subr.bf16.mxu0 0
        %759 = vmatpush1.bf16.msra.mxu0 0
        %760 = vmatprep.subr.bf16.mxu0 0
        %761 = vmatpush1.bf16.msra.mxu0 0
        %762 = vmatprep.subr.bf16.mxu0 0
        %763 = vmatpush1.bf16.msra.mxu0 0
        %764 = vmatprep.subr.bf16.mxu0 0
        %765 = vmatpush1.bf16.msra.mxu0 0
        %766 = vmatprep.subr.bf16.mxu0 0
        %767 = vmatpush1.bf16.msra.mxu0 0
        %768 = vmatprep.subr.bf16.mxu0 0
        %769 = vmatpush1.bf16.msra.mxu0 0
        %770 = vmatprep.subr.bf16.mxu0 0
        %771 = vmatpush1.bf16.msra.mxu0 0
        %772 = vmatprep.subr.bf16.mxu0 0
        %773 = vmatpush1.bf16.msra.mxu0 0
        %774 = vmatprep.subr.bf16.mxu0 0
        %775 = vmatpush1.bf16.msra.mxu0 0
        %776 = vmatprep.subr.bf16.mxu0 0
        %777 = vmatpush1.bf16.msra.mxu0 0
        %778 = vmatprep.subr.bf16.mxu0 0
        %779 = vmatpush1.bf16.msra.mxu0 0
        %780 = vmatprep.subr.bf16.mxu0 0
        %781 = vmatpush1.bf16.msra.mxu0 0
        %782 = vmatprep.subr.bf16.mxu0 0
        %783 = vmatpush1.bf16.msra.mxu0 0
        %784 = vmatprep.mubr.bf16.mxu0 0
        %785 = vmatmul.mubr.bf16.gmra.mrb[0].mxu0 %v746
        %v786 = vpop.f32.mrb[0].mxu0
        %v787 = vadd.f32 0.0, %v786
        %v788 = vpop.f32.mrb[0].mxu0
        %v789 = vpop.f32.mrb[0].mxu0
        %v790 = vpop.f32.mrb[0].mxu0
        %791 = vdwg.mxu0
        %v792 = vpack.c.bf16 %v787, %v787
        %v793 = vld [vmem:[#allocation12] sm:$0xf]
        %795 = vrot.lane.b32.xlu0 %v683, 120
        %v796 = vpop.permute.xlu0 %795
        %v798 = vunpack.c.l.b16 %v684
        %v799 = vpack.c.b16 %v798, %v798
        %800 = vrot.lane.b32.xlu0 %v799, 120
        %v801 = vpop.permute.xlu0 %800
        %v803 = vsel %vm686, %v796, 0
        %v806 = vsel %vm686, %v801, 0
        %808 = vmatprep.subr.bf16.mxu0 0
        %809 = vmatpush1.bf16.xpose.msra.mxu0 %v806
        %810 = vmatprep.subr.bf16.mxu0 0
        %811 = vmatpush1.bf16.xpose.msra.mxu0 0
        %812 = vmatprep.subr.bf16.mxu0 0
        %813 = vmatpush1.bf16.xpose.msra.mxu0 0
        %814 = vmatprep.subr.bf16.mxu0 0
        %815 = vmatpush1.bf16.xpose.msra.mxu0 0
        %816 = vmatprep.subr.bf16.mxu0 0
        %817 = vmatpush1.bf16.xpose.msra.mxu0 0
        %818 = vmatprep.subr.bf16.mxu0 0
        %819 = vmatpush1.bf16.xpose.msra.mxu0 0
        %820 = vmatprep.subr.bf16.mxu0 0
        %821 = vmatpush1.bf16.xpose.msra.mxu0 0
        %822 = vmatprep.subr.bf16.mxu0 0
        %823 = vmatpush1.bf16.xpose.msra.mxu0 0
        %824 = vmatprep.subr.bf16.mxu0 0
        %825 = vmatpush1.bf16.xpose.msra.mxu0 0
        %826 = vmatprep.subr.bf16.mxu0 0
        %827 = vmatpush1.bf16.xpose.msra.mxu0 0
        %828 = vmatprep.subr.bf16.mxu0 0
        %829 = vmatpush1.bf16.xpose.msra.mxu0 0
        %830 = vmatprep.subr.bf16.mxu0 0
        %831 = vmatpush1.bf16.xpose.msra.mxu0 0
        %832 = vmatprep.subr.bf16.mxu0 0
        %833 = vmatpush1.bf16.xpose.msra.mxu0 0
        %834 = vmatprep.subr.bf16.mxu0 0
        %835 = vmatpush1.bf16.xpose.msra.mxu0 0
        %836 = vmatprep.subr.bf16.mxu0 0
        %837 = vmatpush1.bf16.xpose.msra.mxu0 0
        %838 = vmatprep.subr.bf16.mxu0 0
        %839 = vmatpush1.bf16.xpose.msra.mxu0 0
        %840 = vmatprep.mubr.bf16.mxu0 0
        %841 = vmatmul.mubr.bf16.gmra.mrb[0].mxu0 %v803
        %v842 = vpop.f32.mrb[0].mxu0
        %v843 = vadd.f32 0.0, %v842
        %v844 = vpop.f32.mrb[0].mxu0
        %v845 = vpop.f32.mrb[0].mxu0
        %v846 = vpop.f32.mrb[0].mxu0
        %847 = vdwg.mxu0
        %v848 = vsel %vm686, %v843, -inf
        %849 = vmax.xlane.f32.xlu0 %v848
        %v850 = vpop.xlane.xlu0 %849
        %v851 = vsub.f32 %v843, %v850
        %v852 = vmul.f32 %v851, 1.442695
        %v853 = vpow.pop %v852
        %v854 = vsel %vm686, %v853, 0.0
        %855 = vadd.xlane.f32.xlu0 %v854
        %v856 = vpop.xlane.xlu0 %855
        %v857 = vrcp.pop %v856
        %v858 = vmul.f32 %v853, %v857
        %v859 = vpack.c.bf16 %v858, %v858
        %v861 = vunpack.c.l.b16 %v685
        %v862 = vpack.c.b16 %v861, %v861
        %863 = vrot.lane.b32.xlu0 %v862, 120
        %v864 = vpop.permute.xlu0 %863
        %v866 = vsel %vm686, %v859, 0
        %v869 = vsel %vm748, %v864, 0
        %871 = vmatprep.subr.bf16.mxu0 0
        %872 = vmatpush1.bf16.msra.mxu0 %v869
        %873 = vmatprep.subr.bf16.mxu0 0
        %874 = vmatpush1.bf16.msra.mxu0 0
        %875 = vmatprep.subr.bf16.mxu0 0
        %876 = vmatpush1.bf16.msra.mxu0 0
        %877 = vmatprep.subr.bf16.mxu0 0
        %878 = vmatpush1.bf16.msra.mxu0 0
        %879 = vmatprep.subr.bf16.mxu0 0
        %880 = vmatpush1.bf16.msra.mxu0 0
        %881 = vmatprep.subr.bf16.mxu0 0
        %882 = vmatpush1.bf16.msra.mxu0 0
        %883 = vmatprep.subr.bf16.mxu0 0
        %884 = vmatpush1.bf16.msra.mxu0 0
        %885 = vmatprep.subr.bf16.mxu0 0
        %886 = vmatpush1.bf16.msra.mxu0 0
        %887 = vmatprep.subr.bf16.mxu0 0
        %888 = vmatpush1.bf16.msra.mxu0 0
        %889 = vmatprep.subr.bf16.mxu0 0
        %890 = vmatpush1.bf16.msra.mxu0 0
        %891 = vmatprep.subr.bf16.mxu0 0
        %892 = vmatpush1.bf16.msra.mxu0 0
        %893 = vmatprep.subr.bf16.mxu0 0
        %894 = vmatpush1.bf16.msra.mxu0 0
        %895 = vmatprep.subr.bf16.mxu0 0
        %896 = vmatpush1.bf16.msra.mxu0 0
        %897 = vmatprep.subr.bf16.mxu0 0
        %898 = vmatpush1.bf16.msra.mxu0 0
        %899 = vmatprep.subr.bf16.mxu0 0
        %900 = vmatpush1.bf16.msra.mxu0 0
        %901 = vmatprep.subr.bf16.mxu0 0
        %902 = vmatpush1.bf16.msra.mxu0 0
        %903 = vmatprep.mubr.bf16.mxu0 0
        %904 = vmatmul.mubr.bf16.gmra.mrb[0].mxu0 %v866
        %v905 = vpop.f32.mrb[0].mxu0
        %v906 = vadd.f32 0.0, %v905
        %v907 = vpop.f32.mrb[0].mxu0
        %v908 = vpop.f32.mrb[0].mxu0
        %v909 = vpop.f32.mrb[0].mxu0
        %910 = vdwg.mxu0
        %v911 = vpack.c.bf16 %v906, %v906
        %v912 = vld [vmem:[#allocation12 + $0x4] sm:$0xf]
        %v914 = vsel %vm686, %v911, 0
        %v917 = vsel %vm748, %v912, 0
        %919 = vmatprep.subr.bf16.mxu0 0
        %920 = vmatpush1.bf16.msra.mxu0 %v917
        %921 = vmatprep.subr.bf16.mxu0 0
        %922 = vmatpush1.bf16.msra.mxu0 0
        %923 = vmatprep.subr.bf16.mxu0 0
        %924 = vmatpush1.bf16.msra.mxu0 0
        %925 = vmatprep.subr.bf16.mxu0 0
        %926 = vmatpush1.bf16.msra.mxu0 0
        %927 = vmatprep.subr.bf16.mxu0 0
        %928 = vmatpush1.bf16.msra.mxu0 0
        %929 = vmatprep.subr.bf16.mxu0 0
        %930 = vmatpush1.bf16.msra.mxu0 0
        %931 = vmatprep.subr.bf16.mxu0 0
        %932 = vmatpush1.bf16.msra.mxu0 0
        %933 = vmatprep.subr.bf16.mxu0 0
        %934 = vmatpush1.bf16.msra.mxu0 0
        %935 = vmatprep.subr.bf16.mxu0 0
        %936 = vmatpush1.bf16.msra.mxu0 0
        %937 = vmatprep.subr.bf16.mxu0 0
        %938 = vmatpush1.bf16.msra.mxu0 0
        %939 = vmatprep.subr.bf16.mxu0 0
        %940 = vmatpush1.bf16.msra.mxu0 0
        %941 = vmatprep.subr.bf16.mxu0 0
        %942 = vmatpush1.bf16.msra.mxu0 0
        %943 = vmatprep.subr.bf16.mxu0 0
        %944 = vmatpush1.bf16.msra.mxu0 0
        %945 = vmatprep.subr.bf16.mxu0 0
        %946 = vmatpush1.bf16.msra.mxu0 0
        %947 = vmatprep.subr.bf16.mxu0 0
        %948 = vmatpush1.bf16.msra.mxu0 0
        %949 = vmatprep.subr.bf16.mxu0 0
        %950 = vmatpush1.bf16.msra.mxu0 0
        %951 = vmatprep.mubr.bf16.mxu0 0
        %952 = vmatmul.mubr.bf16.gmra.mrb[0].mxu0 %v914
        %v953 = vpop.f32.mrb[0].mxu0
        %v954 = vadd.f32 0.0, %v953
        %v955 = vpop.f32.mrb[0].mxu0
        %v956 = vpop.f32.mrb[0].mxu0
        %v957 = vpop.f32.mrb[0].mxu0
        %958 = vdwg.mxu0
        %v960 = vsel %vm686, %v792, 0
        %v963 = vsel %vm748, %v793, 0
        %965 = vmatprep.subr.bf16.mxu0 0
        %966 = vmatpush1.bf16.msra.mxu0 %v963
        %967 = vmatprep.subr.bf16.mxu0 0
        %968 = vmatpush1.bf16.msra.mxu0 0
        %969 = vmatprep.subr.bf16.mxu0 0
        %970 = vmatpush1.bf16.msra.mxu0 0
        %971 = vmatprep.subr.bf16.mxu0 0
        %972 = vmatpush1.bf16.msra.mxu0 0
        %973 = vmatprep.subr.bf16.mxu0 0
        %974 = vmatpush1.bf16.msra.mxu0 0
        %975 = vmatprep.subr.bf16.mxu0 0
        %976 = vmatpush1.bf16.msra.mxu0 0
        %977 = vmatprep.subr.bf16.mxu0 0
        %978 = vmatpush1.bf16.msra.mxu0 0
        %979 = vmatprep.subr.bf16.mxu0 0
        %980 = vmatpush1.bf16.msra.mxu0 0
        %981 = vmatprep.subr.bf16.mxu0 0
        %982 = vmatpush1.bf16.msra.mxu0 0
        %983 = vmatprep.subr.bf16.mxu0 0
        %984 = vmatpush1.bf16.msra.mxu0 0
        %985 = vmatprep.subr.bf16.mxu0 0
        %986 = vmatpush1.bf16.msra.mxu0 0
        %987 = vmatprep.subr.bf16.mxu0 0
        %988 = vmatpush1.bf16.msra.mxu0 0
        %989 = vmatprep.subr.bf16.mxu0 0
        %990 = vmatpush1.bf16.msra.mxu0 0
        %991 = vmatprep.subr.bf16.mxu0 0
        %992 = vmatpush1.bf16.msra.mxu0 0
        %993 = vmatprep.subr.bf16.mxu0 0
        %994 = vmatpush1.bf16.msra.mxu0 0
        %995 = vmatprep.subr.bf16.mxu0 0
        %996 = vmatpush1.bf16.msra.mxu0 0
        %997 = vmatprep.mubr.bf16.mxu0 0
        %998 = vmatmul.mubr.bf16.gmra.mrb[0].mxu0 %v960
        %v999 = vpop.f32.mrb[0].mxu0
        %v1000 = vadd.f32 %v954, %v999
        %v1001 = vpop.f32.mrb[0].mxu0
        %v1002 = vpop.f32.mrb[0].mxu0
        %v1003 = vpop.f32.mrb[0].mxu0
        %1004 = vdwg.mxu0
        %1005 = vrot.lane.b32.xlu0 %v683, 112
        %v1006 = vpop.permute.xlu0 %1005
        %1007 = vrot.lane.b32.xlu0 %v799, 112
        %v1008 = vpop.permute.xlu0 %1007
        %v1010 = vsel %vm686, %v1006, 0
        %v1013 = vsel %vm686, %v1008, 0
        %1015 = vmatprep.subr.bf16.mxu0 0
        %1016 = vmatpush1.bf16.xpose.msra.mxu0 %v1013
        %1017 = vmatprep.subr.bf16.mxu0 0
        %1018 = vmatpush1.bf16.xpose.msra.mxu0 0
        %1019 = vmatprep.subr.bf16.mxu0 0
        %1020 = vmatpush1.bf16.xpose.msra.mxu0 0
        %1021 = vmatprep.subr.bf16.mxu0 0
        %1022 = vmatpush1.bf16.xpose.msra.mxu0 0
        %1023 = vmatprep.subr.bf16.mxu0 0
        %1024 = vmatpush1.bf16.xpose.msra.mxu0 0
        %1025 = vmatprep.subr.bf16.mxu0 0
        %1026 = vmatpush1.bf16.xpose.msra.mxu0 0
        %1027 = vmatprep.subr.bf16.mxu0 0
        %1028 = vmatpush1.bf16.xpose.msra.mxu0 0
        %1029 = vmatprep.subr.bf16.mxu0 0
        %1030 = vmatpush1.bf16.xpose.msra.mxu0 0
        %1031 = vmatprep.subr.bf16.mxu0 0
        %1032 = vmatpush1.bf16.xpose.msra.mxu0 0
        %1033 = vmatprep.subr.bf16.mxu0 0
        %1034 = vmatpush1.bf16.xpose.msra.mxu0 0
        %1035 = vmatprep.subr.bf16.mxu0 0
        %1036 = vmatpush1.bf16.xpose.msra.mxu0 0
        %1037 = vmatprep.subr.bf16.mxu0 0
        %1038 = vmatpush1.bf16.xpose.msra.mxu0 0
        %1039 = vmatprep.subr.bf16.mxu0 0
        %1040 = vmatpush1.bf16.xpose.msra.mxu0 0
        %1041 = vmatprep.subr.bf16.mxu0 0
        %1042 = vmatpush1.bf16.xpose.msra.mxu0 0
        %1043 = vmatprep.subr.bf16.mxu0 0
        %1044 = vmatpush1.bf16.xpose.msra.mxu0 0
        %1045 = vmatprep.subr.bf16.mxu0 0
        %1046 = vmatpush1.bf16.xpose.msra.mxu0 0
        %1047 = vmatprep.mubr.bf16.mxu0 0
        %1048 = vmatmul.mubr.bf16.gmra.mrb[0].mxu0 %v1010
        %v1049 = vpop.f32.mrb[0].mxu0
        %v1050 = vadd.f32 0.0, %v1049
        %v1051 = vpop.f32.mrb[0].mxu0
        %v1052 = vpop.f32.mrb[0].mxu0
        %v1053 = vpop.f32.mrb[0].mxu0
        %1054 = vdwg.mxu0
        %v1055 = vsel %vm686, %v1050, -inf
        %1056 = vmax.xlane.f32.xlu0 %v1055
        %v1057 = vpop.xlane.xlu0 %1056
        %v1058 = vsub.f32 %v1050, %v1057
        %v1059 = vmul.f32 %v1058, 1.442695
        %v1060 = vpow.pop %v1059
        %v1061 = vsel %vm686, %v1060, 0.0
        %1062 = vadd.xlane.f32.xlu0 %v1061
        %v1063 = vpop.xlane.xlu0 %1062
        %v1064 = vrcp.pop %v1063
        %v1065 = vmul.f32 %v1060, %v1064
        %v1066 = vpack.c.bf16 %v1065, %v1065
        %1067 = vrot.lane.b32.xlu0 %v862, 112
        %v1068 = vpop.permute.xlu0 %1067
        %v1070 = vsel %vm686, %v1066, 0
        %v1073 = vsel %vm748, %v1068, 0
        %1075 = vmatprep.subr.bf16.mxu0 0
        %1076 = vmatpush1.bf16.msra.mxu0 %v1073
        %1077 = vmatprep.subr.bf16.mxu0 0
        %1078 = vmatpush1.bf16.msra.mxu0 0
        %1079 = vmatprep.subr.bf16.mxu0 0
        %1080 = vmatpush1.bf16.msra.mxu0 0
        %1081 = vmatprep.subr.bf16.mxu0 0
        %1082 = vmatpush1.bf16.msra.mxu0 0
        %1083 = vmatprep.subr.bf16.mxu0 0
        %1084 = vmatpush1.bf16.msra.mxu0 0
        %1085 = vmatprep.subr.bf16.mxu0 0
        %1086 = vmatpush1.bf16.msra.mxu0 0
        %1087 = vmatprep.subr.bf16.mxu0 0
        %1088 = vmatpush1.bf16.msra.mxu0 0
        %1089 = vmatprep.subr.bf16.mxu0 0
        %1090 = vmatpush1.bf16.msra.mxu0 0
        %1091 = vmatprep.subr.bf16.mxu0 0
        %1092 = vmatpush1.bf16.msra.mxu0 0
        %1093 = vmatprep.subr.bf16.mxu0 0
        %1094 = vmatpush1.bf16.msra.mxu0 0
        %1095 = vmatprep.subr.bf16.mxu0 0
        %1096 = vmatpush1.bf16.msra.mxu0 0
        %1097 = vmatprep.subr.bf16.mxu0 0
        %1098 = vmatpush1.bf16.msra.mxu0 0
        %1099 = vmatprep.subr.bf16.mxu0 0
        %1100 = vmatpush1.bf16.msra.mxu0 0
        %1101 = vmatprep.subr.bf16.mxu0 0
        %1102 = vmatpush1.bf16.msra.mxu0 0
        %1103 = vmatprep.subr.bf16.mxu0 0
        %1104 = vmatpush1.bf16.msra.mxu0 0
        %1105 = vmatprep.subr.bf16.mxu0 0
        %1106 = vmatpush1.bf16.msra.mxu0 0
        %1107 = vmatprep.mubr.bf16.mxu0 0
        %1108 = vmatmul.mubr.bf16.gmra.mrb[0].mxu0 %v1070
        %v1109 = vpop.f32.mrb[0].mxu0
        %v1110 = vadd.f32 0.0, %v1109
        %v1111 = vpop.f32.mrb[0].mxu0
        %v1112 = vpop.f32.mrb[0].mxu0
        %v1113 = vpop.f32.mrb[0].mxu0
        %1114 = vdwg.mxu0
        %v1115 = vpack.c.bf16 %v1110, %v1110
        %v1116 = vld [vmem:[#allocation12 + $0x8] sm:$0xf]
        %v1118 = vsel %vm686, %v1115, 0
        %v1121 = vsel %vm748, %v1116, 0
        %1123 = vmatprep.subr.bf16.mxu0 0
        %1124 = vmatpush1.bf16.msra.mxu0 %v1121
        %1125 = vmatprep.subr.bf16.mxu0 0
        %1126 = vmatpush1.bf16.msra.mxu0 0
        %1127 = vmatprep.subr.bf16.mxu0 0
        %1128 = vmatpush1.bf16.msra.mxu0 0
        %1129 = vmatprep.subr.bf16.mxu0 0
        %1130 = vmatpush1.bf16.msra.mxu0 0
        %1131 = vmatprep.subr.bf16.mxu0 0
        %1132 = vmatpush1.bf16.msra.mxu0 0
        %1133 = vmatprep.subr.bf16.mxu0 0
        %1134 = vmatpush1.bf16.msra.mxu0 0
        %1135 = vmatprep.subr.bf16.mxu0 0
        %1136 = vmatpush1.bf16.msra.mxu0 0
        %1137 = vmatprep.subr.bf16.mxu0 0
        %1138 = vmatpush1.bf16.msra.mxu0 0
        %1139 = vmatprep.subr.bf16.mxu0 0
        %1140 = vmatpush1.bf16.msra.mxu0 0
        %1141 = vmatprep.subr.bf16.mxu0 0
        %1142 = vmatpush1.bf16.msra.mxu0 0
        %1143 = vmatprep.subr.bf16.mxu0 0
        %1144 = vmatpush1.bf16.msra.mxu0 0
        %1145 = vmatprep.subr.bf16.mxu0 0
        %1146 = vmatpush1.bf16.msra.mxu0 0
        %1147 = vmatprep.subr.bf16.mxu0 0
        %1148 = vmatpush1.bf16.msra.mxu0 0
        %1149 = vmatprep.subr.bf16.mxu0 0
        %1150 = vmatpush1.bf16.msra.mxu0 0
        %1151 = vmatprep.subr.bf16.mxu0 0
        %1152 = vmatpush1.bf16.msra.mxu0 0
        %1153 = vmatprep.subr.bf16.mxu0 0
        %1154 = vmatpush1.bf16.msra.mxu0 0
        %1155 = vmatprep.mubr.bf16.mxu0 0
        %1156 = vmatmul.mubr.bf16.gmra.mrb[0].mxu0 %v1118
        %v1157 = vpop.f32.mrb[0].mxu0
        %v1158 = vadd.f32 0.0, %v1157
        %v1159 = vpop.f32.mrb[0].mxu0
        %v1160 = vpop.f32.mrb[0].mxu0
        %v1161 = vpop.f32.mrb[0].mxu0
        %1162 = vdwg.mxu0
        %v1163 = vadd.f32 %v1000, %v1158
        %1164 = vrot.lane.b32.xlu0 %v683, 104
        %v1165 = vpop.permute.xlu0 %1164
        %1166 = vrot.lane.b32.xlu0 %v799, 104
        %v1167 = vpop.permute.xlu0 %1166
        %v1169 = vsel %vm686, %v1165, 0
        %v1172 = vsel %vm686, %v1167, 0
        %1174 = vmatprep.subr.bf16.mxu0 0
        %1175 = vmatpush1.bf16.xpose.msra.mxu0 %v1172
        %1176 = vmatprep.subr.bf16.mxu0 0
        %1177 = vmatpush1.bf16.xpose.msra.mxu0 0
        %1178 = vmatprep.subr.bf16.mxu0 0
        %1179 = vmatpush1.bf16.xpose.msra.mxu0 0
        %1180 = vmatprep.subr.bf16.mxu0 0
        %1181 = vmatpush1.bf16.xpose.msra.mxu0 0
        %1182 = vmatprep.subr.bf16.mxu0 0
        %1183 = vmatpush1.bf16.xpose.msra.mxu0 0
        %1184 = vmatprep.subr.bf16.mxu0 0
        %1185 = vmatpush1.bf16.xpose.msra.mxu0 0
        %1186 = vmatprep.subr.bf16.mxu0 0
        %1187 = vmatpush1.bf16.xpose.msra.mxu0 0
        %1188 = vmatprep.subr.bf16.mxu0 0
        %1189 = vmatpush1.bf16.xpose.msra.mxu0 0
        %1190 = vmatprep.subr.bf16.mxu0 0
        %1191 = vmatpush1.bf16.xpose.msra.mxu0 0
        %1192 = vmatprep.subr.bf16.mxu0 0
        %1193 = vmatpush1.bf16.xpose.msra.mxu0 0
        %1194 = vmatprep.subr.bf16.mxu0 0
        %1195 = vmatpush1.bf16.xpose.msra.mxu0 0
        %1196 = vmatprep.subr.bf16.mxu0 0
        %1197 = vmatpush1.bf16.xpose.msra.mxu0 0
        %1198 = vmatprep.subr.bf16.mxu0 0
        %1199 = vmatpush1.bf16.xpose.msra.mxu0 0
        %1200 = vmatprep.subr.bf16.mxu0 0
        %1201 = vmatpush1.bf16.xpose.msra.mxu0 0
        %1202 = vmatprep.subr.bf16.mxu0 0
        %1203 = vmatpush1.bf16.xpose.msra.mxu0 0
        %1204 = vmatprep.subr.bf16.mxu0 0
        %1205 = vmatpush1.bf16.xpose.msra.mxu0 0
        %1206 = vmatprep.mubr.bf16.mxu0 0
        %1207 = vmatmul.mubr.bf16.gmra.mrb[0].mxu0 %v1169
        %v1208 = vpop.f32.mrb[0].mxu0
        %v1209 = vadd.f32 0.0, %v1208
        %v1210 = vpop.f32.mrb[0].mxu0
        %v1211 = vpop.f32.mrb[0].mxu0
        %v1212 = vpop.f32.mrb[0].mxu0
        %1213 = vdwg.mxu0
        %v1214 = vsel %vm686, %v1209, -inf
        %1215 = vmax.xlane.f32.xlu0 %v1214
        %v1216 = vpop.xlane.xlu0 %1215
        %v1217 = vsub.f32 %v1209, %v1216
        %v1218 = vmul.f32 %v1217, 1.442695
        %v1219 = vpow.pop %v1218
        %v1220 = vsel %vm686, %v1219, 0.0
        %1221 = vadd.xlane.f32.xlu0 %v1220
        %v1222 = vpop.xlane.xlu0 %1221
        %v1223 = vrcp.pop %v1222
        %v1224 = vmul.f32 %v1219, %v1223
        %v1225 = vpack.c.bf16 %v1224, %v1224
        %1226 = vrot.lane.b32.xlu0 %v862, 104
        %v1227 = vpop.permute.xlu0 %1226
        %v1229 = vsel %vm686, %v1225, 0
        %v1232 = vsel %vm748, %v1227, 0
        %1234 = vmatprep.subr.bf16.mxu0 0
        %1235 = vmatpush1.bf16.msra.mxu0 %v1232
        %1236 = vmatprep.subr.bf16.mxu0 0
        %1237 = vmatpush1.bf16.msra.mxu0 0
        %1238 = vmatprep.subr.bf16.mxu0 0
        %1239 = vmatpush1.bf16.msra.mxu0 0
        %1240 = vmatprep.subr.bf16.mxu0 0
        %1241 = vmatpush1.bf16.msra.mxu0 0
        %1242 = vmatprep.subr.bf16.mxu0 0
        %1243 = vmatpush1.bf16.msra.mxu0 0
        %1244 = vmatprep.subr.bf16.mxu0 0
        %1245 = vmatpush1.bf16.msra.mxu0 0
        %1246 = vmatprep.subr.bf16.mxu0 0
        %1247 = vmatpush1.bf16.msra.mxu0 0
        %1248 = vmatprep.subr.bf16.mxu0 0
        %1249 = vmatpush1.bf16.msra.mxu0 0
        %1250 = vmatprep.subr.bf16.mxu0 0
        %1251 = vmatpush1.bf16.msra.mxu0 0
        %1252 = vmatprep.subr.bf16.mxu0 0
        %1253 = vmatpush1.bf16.msra.mxu0 0
        %1254 = vmatprep.subr.bf16.mxu0 0
        %1255 = vmatpush1.bf16.msra.mxu0 0
        %1256 = vmatprep.subr.bf16.mxu0 0
        %1257 = vmatpush1.bf16.msra.mxu0 0
        %1258 = vmatprep.subr.bf16.mxu0 0
        %1259 = vmatpush1.bf16.msra.mxu0 0
        %1260 = vmatprep.subr.bf16.mxu0 0
        %1261 = vmatpush1.bf16.msra.mxu0 0
        %1262 = vmatprep.subr.bf16.mxu0 0
        %1263 = vmatpush1.bf16.msra.mxu0 0
        %1264 = vmatprep.subr.bf16.mxu0 0
        %1265 = vmatpush1.bf16.msra.mxu0 0
        %1266 = vmatprep.mubr.bf16.mxu0 0
        %1267 = vmatmul.mubr.bf16.gmra.mrb[0].mxu0 %v1229
        %v1268 = vpop.f32.mrb[0].mxu0
        %v1269 = vadd.f32 0.0, %v1268
        %v1270 = vpop.f32.mrb[0].mxu0
        %v1271 = vpop.f32.mrb[0].mxu0
        %v1272 = vpop.f32.mrb[0].mxu0
        %1273 = vdwg.mxu0
        %v1274 = vpack.c.bf16 %v1269, %v1269
        %v1275 = vld [vmem:[#allocation12 + $0xc] sm:$0xf]
        %v1277 = vsel %vm686, %v1274, 0
        %v1280 = vsel %vm748, %v1275, 0
        %1282 = vmatprep.subr.bf16.mxu0 0
        %1283 = vmatpush1.bf16.msra.mxu0 %v1280
        %1284 = vmatprep.subr.bf16.mxu0 0
        %1285 = vmatpush1.bf16.msra.mxu0 0
        %1286 = vmatprep.subr.bf16.mxu0 0
        %1287 = vmatpush1.bf16.msra.mxu0 0
        %1288 = vmatprep.subr.bf16.mxu0 0
        %1289 = vmatpush1.bf16.msra.mxu0 0
        %1290 = vmatprep.subr.bf16.mxu0 0
        %1291 = vmatpush1.bf16.msra.mxu0 0
        %1292 = vmatprep.subr.bf16.mxu0 0
        %1293 = vmatpush1.bf16.msra.mxu0 0
        %1294 = vmatprep.subr.bf16.mxu0 0
        %1295 = vmatpush1.bf16.msra.mxu0 0
        %1296 = vmatprep.subr.bf16.mxu0 0
        %1297 = vmatpush1.bf16.msra.mxu0 0
        %1298 = vmatprep.subr.bf16.mxu0 0
        %1299 = vmatpush1.bf16.msra.mxu0 0
        %1300 = vmatprep.subr.bf16.mxu0 0
        %1301 = vmatpush1.bf16.msra.mxu0 0
        %1302 = vmatprep.subr.bf16.mxu0 0
        %1303 = vmatpush1.bf16.msra.mxu0 0
        %1304 = vmatprep.subr.bf16.mxu0 0
        %1305 = vmatpush1.bf16.msra.mxu0 0
        %1306 = vmatprep.subr.bf16.mxu0 0
        %1307 = vmatpush1.bf16.msra.mxu0 0
        %1308 = vmatprep.subr.bf16.mxu0 0
        %1309 = vmatpush1.bf16.msra.mxu0 0
        %1310 = vmatprep.subr.bf16.mxu0 0
        %1311 = vmatpush1.bf16.msra.mxu0 0
        %1312 = vmatprep.subr.bf16.mxu0 0
        %1313 = vmatpush1.bf16.msra.mxu0 0
        %1314 = vmatprep.mubr.bf16.mxu0 0
        %1315 = vmatmul.mubr.bf16.gmra.mrb[0].mxu0 %v1277
        %v1316 = vpop.f32.mrb[0].mxu0
        %v1317 = vadd.f32 0.0, %v1316
        %v1318 = vpop.f32.mrb[0].mxu0
        %v1319 = vpop.f32.mrb[0].mxu0
        %v1320 = vpop.f32.mrb[0].mxu0
        %1321 = vdwg.mxu0
        %v1322 = vadd.f32 %v1163, %v1317
        %v1323 = vld [vmem:[%s9] sm:$0x1]
        %v1325 = vlaneseq
        %v1326 = vshrl.u32 %v1325, 7
        %v1327 = vsub.s32 0, %v1326
        %v1328 = vrot.slane %v1323, %v1327
        %v1330 = vadd.f32 %v1322, %v1328
        %1331 = vst.msk [vmem:[%s471] sm:$0xff] %vm639, %v1330
        %s1332 = sand.u32 %s275, 1
        %s1333 = scalar_lea.sflag [#allocation6], %s1332
        %s1334 = sand.u32 %s275, 1
        %s1335 = smul.addr %s1334, 8
        %s1336 = scalar_lea.vmem [#allocation13], %s1335
        // Predicated region
        $region85: #{tpu_custom_call.1} parent=59 // pred_check
          %p1337 = pneg %p285
        $region86: #{tpu_custom_call.1} parent=59 // pred_check_branch
          %1339 = sbr.rel (%p1337) target = $region88
        $region87: #{tpu_custom_call.1} parent=59 // pred_region
          %s1341 = ssub.s32 128, 128
          %1342 = vsyncadd %s1333, %s1341
          %s1343 = sadd.s32 %s36, %s35
          %s1344 = smul.addr %s1343, 128
          %s1345 = scalar_lea.hbm %s10, %s1344
          %s1347 = sshll.u32 %s1336, 4
          %s1348 = int_to_ptr.vmem [resolvable:$true] %s1347
          %1350 = dma.vmem_to_hbm [thread:$0]  %s1348, 128, %s1345, %s1333
        $region88: #{tpu_custom_call.1} parent=59 // pred_fallthru
          _
      $region60: #{tpu_custom_call.1} parent=5 // pred_fallthru
        _
      %p1351 = scmp.le.s32.totalorder 2, %s26
      // Predicated region
      $region89: #{tpu_custom_call.1} parent=5 // pred_check
        %p1352 = pneg %p1351
      $region90: #{tpu_custom_call.1} parent=5 // pred_check_branch
        %1354 = sbr.rel (%p1352) target = $region92
      $region91: #{tpu_custom_call.1} parent=5 // pred_region
        %s1355 = ssub.s32 %s26, 2
        // Predicated region
        $region93: #{tpu_custom_call.1} parent=91 // pred_check
          %p1356 = pneg %p291
        $region94: #{tpu_custom_call.1} parent=91 // pred_check_branch
          %1358 = sbr.rel (%p1356) target = $region96
        $region95: #{tpu_custom_call.1} parent=91 // pred_region
          %s1359 = sand.u32 %s276, 1
          %s1360 = scalar_lea.sflag [#allocation6], %s1359
          %s1361 = sand.u32 %s276, 1
          %s1362 = smul.addr %s1361, 8
          %s1363 = scalar_lea.vmem [#allocation13], %s1362
          %1364 = dma.done %s1360, 128
        $region96: #{tpu_custom_call.1} parent=91 // pred_fallthru
          _
      $region92: #{tpu_custom_call.1} parent=5 // pred_fallthru
        _
    $region6: #{tpu_custom_call.1} parent=1 // loop_footer
      %s30 = sadd.s32 1, %s26
    $region7: #{tpu_custom_call.1} parent=1 // loop_footer_branch
      %25 = sbr.rel target = $region3
    $region8: #{tpu_custom_call.1} parent=1 // loop_exit
      _
    %1365 = vsyncpa [#allocation5], 1
    %s1366 = scalar_lea.sflag [#allocation5], 1
    %1367 = vsyncpa %s1366, 1
    %1368 = vsyncpa [#allocation8], 1
    %s1369 = scalar_lea.sflag [#allocation8], 1
    %1370 = vsyncpa %s1369, 1
    %1371 = vsyncpa [#allocation11], 1
    %1372 = vsyncpa [#allocation6], 1
    %s1373 = scalar_lea.sflag [#allocation6], 1
    %1374 = vsyncpa %s1373, 1

</llo_original>
